<compile_context>
chip_gen: v5e
topology: v5e:2x2
jax: 0.10.0
libtpu: 0.0.40
codegen_flags: <defaults>
</compile_context>

<pallas_src>
import functools

import jax
import jax.numpy as jnp
from jax.experimental import pallas as pl
from jax.experimental.pallas import tpu as pltpu


def gated_mha_kernel(q_ref, k_ref, v_ref,
                     wq_ref, wk_ref, wv_ref, wo_ref,
                     wgq_ref, wga_ref, bg_ref,
                     out_ref,
                     hq_sc, acc_sc,
                     *, num_heads, head_dim):
    """Grid = (batch, kv_tiles); kv axis is a reduction ('arbitrary')."""
    kt = pl.program_id(1)
    n_kt = pl.num_programs(1)

    # ---- per-batch init (first kv tile): Q projection (scale pre-folded into
    # Wq) cached in scratch, and zero the attn_vec accumulator slab. ---------
    @pl.when(kt == 0)
    def _init():
        q = q_ref[0]                                           # (qlen, Dq)
        hq = jnp.dot(q, wq_ref[...], preferred_element_type=jnp.float32)
        hq_sc[...] = hq.astype(hq_sc.dtype)
        acc_sc[...] = jnp.zeros_like(acc_sc)

    # ---- per-kv-tile work ---------------------------------------------------
    k = k_ref[0]                                               # (tk, Dk)
    v = v_ref[0]                                               # (tk, Dv)
    # MXU operands stay in the input dtype; fp32 accumulate via
    # preferred_element_type.  Cast results back to the activation dtype.
    hk = jnp.dot(k, wk_ref[...], preferred_element_type=jnp.float32).astype(k.dtype)
    hv = jnp.dot(v, wv_ref[...], preferred_element_type=jnp.float32).astype(v.dtype)

    # Static unrolled loop over heads writing into the accumulator slab.
    # NOTE: the contraction depth here is head_dim (8 in the demo config),
    # which under-uses the MXU; for real configs pack heads / raise head_dim
    # toward 128 where the layout allows.
    for h in range(num_heads):
        lo = h * head_dim
        hq_h = hq_sc[:, lo:lo + head_dim]                      # (qlen, hd)
        hk_h = hk[:, lo:lo + head_dim]                         # (tk,  hd)
        hv_h = hv[:, lo:lo + head_dim]                         # (tk,  hd)

        # score[i, j] = <q_i, k_j>   ('bind,bjnd->bijn' for this head).
        s = jax.lax.dot_general(
            hq_h, hk_h,
            dimension_numbers=(((1,), (1,)), ((), ())),
            preferred_element_type=jnp.float32)                # (qlen, tk) fp32

        # Legacy implicit-dim nn.Softmax() on 'bijn' -> dim=1 == QUERY axis,
        # i.e. axis 0 of this (i, j) matrix.  fp32 softmax path.
        s = s - jnp.max(s, axis=0, keepdims=True)
        e = jnp.exp(s)
        inv = pl.reciprocal(jnp.sum(e, axis=0, keepdims=True), approx=False)
        p = e * inv

        # attn_vec[i, d] += sum_j p[i, j] * v[j, d]  (accumulate over kv tiles)
        pv = jnp.dot(p.astype(hv_h.dtype), hv_h,
                     preferred_element_type=jnp.float32)       # (qlen, hd)
        acc_sc[:, lo:lo + head_dim] = acc_sc[:, lo:lo + head_dim] + pv

    # ---- per-batch finalize (last kv tile): o_net, gate, blend. ------------
    @pl.when(kt == n_kt - 1)
    def _finalize():
        q = q_ref[0]
        attn_vec = acc_sc[...].astype(wo_ref.dtype)            # (qlen, H)
        attn_out = jnp.dot(attn_vec, wo_ref[...],
                           preferred_element_type=jnp.float32)  # (qlen, Dq) fp32

        # gate = sigmoid([q, attn_out] @ Wg + bg) computed as two matmuls
        # (Wg split host-side) -> no lane-axis concatenate.
        gate = jax.nn.sigmoid(
            jnp.dot(q, wgq_ref[...], preferred_element_type=jnp.float32)
            + jnp.dot(attn_out.astype(wga_ref.dtype), wga_ref[...],
                      preferred_element_type=jnp.float32)
            + bg_ref[...])                                      # (qlen, Dq) fp32

        out = gate * q.astype(jnp.float32) + (1.0 - gate) * attn_out
        # NOTE: for real configs with Dq < 128, consider a lane-dense output
        # layout (fold qlen into the lane dim in the wrapper) to avoid masked
        # partial stores.
        out_ref[0] = out.astype(out_ref.dtype)


def _pick_kv_tile(klen):
    """Pick a kv tile: full length if small, otherwise an 8-aligned divisor."""
    if klen <= 512:
        return klen
    for t in (512, 256, 128):
        if klen % t == 0:
            return t
    return klen


def gated_multi_head_attn(query, key, value, params, *, num_heads, kv_tile=None):
    """params = (WqT, WkT, WvT, WoT, WgT, bg) with weights as (in, out)."""
    WqT, WkT, WvT, WoT, WgT, bg = params
    bsz, qlen, Dq = query.shape
    _, klen, Dk = key.shape
    _, vlen, Dv = value.shape
    H = WqT.shape[1]
    head_dim = H // num_heads

    # --- one-time host-side parameter preprocessing --------------------------
    # Fold the 1/sqrt(head_dim) score scale into the Q projection weight.
    WqT = WqT * jnp.asarray(1.0 / head_dim ** 0.5, WqT.dtype)
    # Split the gate weight so the kernel never concatenates [q, attn_out].
    Wg_q = WgT[:Dq]            # (Dq, Dq)
    Wg_a = WgT[Dq:]            # (Dq, Dq)

    if kv_tile is None:
        kv_tile = _pick_kv_tile(klen)
    assert klen % kv_tile == 0, "klen must be divisible by the kv tile"
    assert kv_tile == klen or kv_tile % 8 == 0, "kv tile must be 8-aligned"
    n_kt = klen // kv_tile

    kernel = functools.partial(gated_mha_kernel,
                               num_heads=num_heads, head_dim=head_dim)

    itemsize = query.dtype.itemsize
    flops = 2 * bsz * (qlen * Dq * H + klen * Dk * H + vlen * Dv * H
                       + 2 * num_heads * qlen * klen * head_dim
                       + qlen * H * Dq + 2 * qlen * Dq * Dq)
    transcendentals = bsz * (num_heads * qlen * klen + qlen * Dq)
    bytes_accessed = (itemsize * (query.size + key.size + value.size + query.size)
                      + 4 * (WqT.size + WkT.size + WvT.size
                             + WoT.size + WgT.size + bg.size))

    return pl.pallas_call(
        kernel,
        out_shape=jax.ShapeDtypeStruct((bsz, qlen, Dq), query.dtype),
        grid=(bsz, n_kt),
        in_specs=[
            pl.BlockSpec((1, qlen, Dq), lambda b, t: (b, 0, 0)),     # q (resident over t)
            pl.BlockSpec((1, kv_tile, Dk), lambda b, t: (b, t, 0)),  # k tile
            pl.BlockSpec((1, kv_tile, Dv), lambda b, t: (b, t, 0)),  # v tile
            pl.BlockSpec((Dq, H), lambda b, t: (0, 0)),              # WqT (pre-scaled)
            pl.BlockSpec((Dk, H), lambda b, t: (0, 0)),              # WkT
            pl.BlockSpec((Dv, H), lambda b, t: (0, 0)),              # WvT
            pl.BlockSpec((H, Dq), lambda b, t: (0, 0)),              # WoT
            pl.BlockSpec((Dq, Dq), lambda b, t: (0, 0)),             # Wg_q
            pl.BlockSpec((Dq, Dq), lambda b, t: (0, 0)),             # Wg_a
            pl.BlockSpec((1, Dq), lambda b, t: (0, 0)),              # bg
        ],
        out_specs=pl.BlockSpec((1, qlen, Dq), lambda b, t: (b, 0, 0)),
        scratch_shapes=[
            pltpu.VMEM((qlen, H), query.dtype),   # cached (pre-scaled) Q projection
            pltpu.VMEM((qlen, H), jnp.float32),   # attn_vec accumulator slab
        ],
        compiler_params=pltpu.CompilerParams(
            dimension_semantics=("parallel", "arbitrary"),
            # Budget tiles against v7x's 64 MiB VMEM; raise this (and kv_tile /
            # buffering depth) for large configs on v6e/v5e's 128 MiB.
            vmem_limit_bytes=32 * 1024 * 1024),
        cost_estimate=pl.CostEstimate(
            flops=int(flops),
            transcendentals=int(transcendentals),
            bytes_accessed=int(bytes_accessed)),
    )(query, key, value, WqT, WkT, WvT, WoT, Wg_q, Wg_a, bg)


def reference_jax(query, key, value, params, *, num_heads):
    WqT, WkT, WvT, WoT, WgT, bg = params
    bsz, qlen, Dq = query.shape
    H = WqT.shape[1]
    hd = H // num_heads
    hq = (query @ WqT).reshape(bsz, qlen, num_heads, hd)
    hk = (key @ WkT).reshape(bsz, key.shape[1], num_heads, hd)
    hv = (value @ WvT).reshape(bsz, value.shape[1], num_heads, hd)
    score = jnp.einsum('bind,bjnd->bijn', hq, hk) * (1.0 / hd ** 0.5)
    score = jax.nn.softmax(score, axis=1)   # PyTorch implicit-dim softmax (dim=1)
    attn_vec = jnp.einsum('bijn,bjnd->bind', score, hv).reshape(bsz, qlen, H)
    attn_out = attn_vec @ WoT
    gate = jax.nn.sigmoid(jnp.concatenate([query, attn_out], axis=-1) @ WgT + bg[0])
    return gate * query + (1.0 - gate) * attn_out


if __name__ == "__main__":
    # Small shapes consistent with the module.
    bsz, qlen, klen = 2, 8, 8
    query_dim = key_dim = value_dim = 32
    hidden_dim, num_heads = 32, 4
    head_dim = hidden_dim // num_heads
    scale = 1.0 / head_dim ** 0.5

    key0 = jax.random.PRNGKey(0)
    ks = jax.random.split(key0, 8)

    # Deterministic parameter init mirroring the module's __init__
    # (normal(0, 1/sqrt(head_dim)) weights, ones bias for g_net).
    # Torch Linear weight is (out, in); we store the transpose (in, out).
    Wq = jax.random.normal(ks[0], (hidden_dim, query_dim), jnp.float32) * scale
    Wk = jax.random.normal(ks[1], (hidden_dim, key_dim), jnp.float32) * scale
    Wv = jax.random.normal(ks[2], (hidden_dim, value_dim), jnp.float32) * scale
    Wo = jax.random.normal(ks[3], (query_dim, hidden_dim), jnp.float32) * scale
    Wg = jax.random.normal(ks[4], (query_dim, 2 * query_dim), jnp.float32) * scale
    bg = jnp.ones((1, query_dim), jnp.float32)
    params = (Wq.T, Wk.T, Wv.T, Wo.T, Wg.T, bg)

    query = jax.random.normal(ks[5], (bsz, qlen, query_dim), jnp.float32)
    key_in = jax.random.normal(ks[6], (bsz, klen, key_dim), jnp.float32)
    value = jax.random.normal(ks[7], (bsz, klen, value_dim), jnp.float32)

    out = gated_multi_head_attn(query, key_in, value, params,
                                num_heads=num_heads)
    out = jax.block_until_ready(out)

    ref = reference_jax(query, key_in, value, params, num_heads=num_heads)
    assert out.shape == (bsz, qlen, query_dim)
    assert jnp.allclose(out, ref, atol=1e-4, rtol=1e-4), "mismatch vs reference"

    print("KERNEL_OK")
</pallas_src>

<mosaic_0001>
module attributes {stable_mosaic.version = 11 : i64} {
  func.func @gated_mha_kernel(%arg0: i32, %arg1: i32, %arg2: memref<1x8x32xf32, #tpu.memory_space<vmem>>, %arg3: memref<1x8x32xf32, #tpu.memory_space<vmem>>, %arg4: memref<1x8x32xf32, #tpu.memory_space<vmem>>, %arg5: memref<32x32xf32, #tpu.memory_space<vmem>>, %arg6: memref<32x32xf32, #tpu.memory_space<vmem>>, %arg7: memref<32x32xf32, #tpu.memory_space<vmem>>, %arg8: memref<32x32xf32, #tpu.memory_space<vmem>>, %arg9: memref<32x32xf32, #tpu.memory_space<vmem>>, %arg10: memref<32x32xf32, #tpu.memory_space<vmem>>, %arg11: memref<1x32xf32, #tpu.memory_space<vmem>>, %arg12: memref<1x8x32xf32, #tpu.memory_space<vmem>>, %arg13: memref<8x32xf32, #tpu.memory_space<vmem>>, %arg14: memref<8x32xf32, #tpu.memory_space<vmem>>) attributes {dimension_semantics = [#tpu.dimension_semantics<parallel>, #tpu.dimension_semantics<arbitrary>], iteration_bounds = array<i64: 2, 1>, scalar_prefetch = 0 : i64, scratch_operands = 2 : i64, tpu.core_type = #tpu.core_type<tc>, window_params = [{transform_indices = @transform_0, window_bounds = array<i64: 1, 8, 32>}, {transform_indices = @transform_1, window_bounds = array<i64: 1, 8, 32>}, {transform_indices = @transform_2, window_bounds = array<i64: 1, 8, 32>}, {pipeline_mode = #tpu.pipeline_mode<synchronous>, transform_indices = @transform_3, window_bounds = array<i64: 32, 32>}, {pipeline_mode = #tpu.pipeline_mode<synchronous>, transform_indices = @transform_4, window_bounds = array<i64: 32, 32>}, {pipeline_mode = #tpu.pipeline_mode<synchronous>, transform_indices = @transform_5, window_bounds = array<i64: 32, 32>}, {pipeline_mode = #tpu.pipeline_mode<synchronous>, transform_indices = @transform_6, window_bounds = array<i64: 32, 32>}, {pipeline_mode = #tpu.pipeline_mode<synchronous>, transform_indices = @transform_7, window_bounds = array<i64: 32, 32>}, {pipeline_mode = #tpu.pipeline_mode<synchronous>, transform_indices = @transform_8, window_bounds = array<i64: 32, 32>}, {pipeline_mode = #tpu.pipeline_mode<synchronous>, transform_indices = @transform_9, window_bounds = array<i64: 1, 32>}, {transform_indices = @transform_10, window_bounds = array<i64: 1, 8, 32>}]} {
    %c0_i32 = arith.constant 0 : i32
    %0 = arith.cmpi eq, %arg1, %c0_i32 : i32
    %1 = arith.extui %0 : i1 to i32
    %c0_i32_0 = arith.constant 0 : i32
    %2 = arith.cmpi ne, %1, %c0_i32_0 : i32
    scf.if %2 {
      %c0_50 = arith.constant 0 : index
      %c0_51 = arith.constant 0 : index
      %c0_52 = arith.constant 0 : index
      %86 = vector.load %arg2[%c0_50, %c0_51, %c0_52] : memref<1x8x32xf32, #tpu.memory_space<vmem>>, vector<1x8x32xf32>
      %87 = vector.shape_cast %86 : vector<1x8x32xf32> to vector<8x32xf32>
      %c0_53 = arith.constant 0 : index
      %c0_54 = arith.constant 0 : index
      %88 = vector.load %arg5[%c0_53, %c0_54] : memref<32x32xf32, #tpu.memory_space<vmem>>, vector<32x32xf32>
      %cst_55 = arith.constant dense<0.000000e+00> : vector<8x32xf32>
      %89 = tpu.matmul %87, %88, %cst_55 {dimension_numbers = #tpu.dot_dimension_numbers<[1], [0], [0], [1], [0, 0, 1, 1], [], []>} : vector<8x32xf32>, vector<32x32xf32>, vector<8x32xf32> -> vector<8x32xf32>
      %c0_56 = arith.constant 0 : index
      %c0_57 = arith.constant 0 : index
      %90 = vector.load %arg13[%c0_56, %c0_57] : memref<8x32xf32, #tpu.memory_space<vmem>>, vector<8x32xf32>
      tpu.vector_store %arg13[%c0_56, %c0_57], %89 {strides = array<i32>} : memref<8x32xf32, #tpu.memory_space<vmem>>, vector<8x32xf32>,
      %cst_58 = arith.constant 0.000000e+00 : f32
      %91 = vector.broadcast %cst_58 : f32 to vector<8x32xf32>
      %c0_59 = arith.constant 0 : index
      %c0_60 = arith.constant 0 : index
      %92 = vector.load %arg14[%c0_59, %c0_60] : memref<8x32xf32, #tpu.memory_space<vmem>>, vector<8x32xf32>
      tpu.vector_store %arg14[%c0_59, %c0_60], %91 {strides = array<i32>} : memref<8x32xf32, #tpu.memory_space<vmem>>, vector<8x32xf32>,
    } else {
    }
    %c0 = arith.constant 0 : index
    %c0_1 = arith.constant 0 : index
    %c0_2 = arith.constant 0 : index
    %3 = vector.load %arg3[%c0, %c0_1, %c0_2] : memref<1x8x32xf32, #tpu.memory_space<vmem>>, vector<1x8x32xf32>
    %4 = vector.shape_cast %3 : vector<1x8x32xf32> to vector<8x32xf32>
    %c0_3 = arith.constant 0 : index
    %c0_4 = arith.constant 0 : index
    %c0_5 = arith.constant 0 : index
    %5 = vector.load %arg4[%c0_3, %c0_4, %c0_5] : memref<1x8x32xf32, #tpu.memory_space<vmem>>, vector<1x8x32xf32>
    %6 = vector.shape_cast %5 : vector<1x8x32xf32> to vector<8x32xf32>
    %c0_6 = arith.constant 0 : index
    %c0_7 = arith.constant 0 : index
    %7 = vector.load %arg6[%c0_6, %c0_7] : memref<32x32xf32, #tpu.memory_space<vmem>>, vector<32x32xf32>
    %cst = arith.constant dense<0.000000e+00> : vector<8x32xf32>
    %8 = tpu.matmul %4, %7, %cst {dimension_numbers = #tpu.dot_dimension_numbers<[1], [0], [0], [1], [0, 0, 1, 1], [], []>} : vector<8x32xf32>, vector<32x32xf32>, vector<8x32xf32> -> vector<8x32xf32>
    %c0_8 = arith.constant 0 : index
    %c0_9 = arith.constant 0 : index
    %9 = vector.load %arg7[%c0_8, %c0_9] : memref<32x32xf32, #tpu.memory_space<vmem>>, vector<32x32xf32>
    %cst_10 = arith.constant dense<0.000000e+00> : vector<8x32xf32>
    %10 = tpu.matmul %6, %9, %cst_10 {dimension_numbers = #tpu.dot_dimension_numbers<[1], [0], [0], [1], [0, 0, 1, 1], [], []>} : vector<8x32xf32>, vector<32x32xf32>, vector<8x32xf32> -> vector<8x32xf32>
    %c0_11 = arith.constant 0 : index
    %c0_12 = arith.constant 0 : index
    %11 = vector.load %arg13[%c0_11, %c0_12] : memref<8x32xf32, #tpu.memory_space<vmem>>, vector<8x8xf32>
    %12 = vector.extract_strided_slice %8 {offsets = [0, 0], sizes = [8, 8], strides = [1, 1]} : vector<8x32xf32> to vector<8x8xf32>
    %13 = vector.extract_strided_slice %10 {offsets = [0, 0], sizes = [8, 8], strides = [1, 1]} : vector<8x32xf32> to vector<8x8xf32>
    %cst_13 = arith.constant dense<0.000000e+00> : vector<8x8xf32>
    %14 = tpu.matmul %11, %12, %cst_13 {dimension_numbers = #tpu.dot_dimension_numbers<[1], [1], [0], [0], [0, 0, 1, 0], [], []>} : vector<8x8xf32>, vector<8x8xf32>, vector<8x8xf32> -> vector<8x8xf32>
    %cst_14 = arith.constant dense<0xFF800000> : vector<8xf32>
    %15 = vector.multi_reduction <maximumf>, %14, %cst_14 [0] : vector<8x8xf32> to vector<8xf32>
    %16 = vector.shape_cast %15 : vector<8xf32> to vector<1x8xf32>
    %17 = vector.broadcast %16 : vector<1x8xf32> to vector<8x8xf32>
    %18 = arith.subf %14, %17 : vector<8x8xf32>
    %19 = math.exp %18 : vector<8x8xf32>
    %cst_15 = arith.constant dense<0.000000e+00> : vector<8xf32>
    %20 = vector.multi_reduction <add>, %19, %cst_15 [0] : vector<8x8xf32> to vector<8xf32>
    %21 = vector.shape_cast %20 : vector<8xf32> to vector<1x8xf32>
    %22 = tpu.reciprocal %21 : vector<1x8xf32> -> vector<1x8xf32>
    %23 = vector.broadcast %22 : vector<1x8xf32> to vector<8x8xf32>
    %24 = arith.mulf %19, %23 : vector<8x8xf32>
    %cst_16 = arith.constant dense<0.000000e+00> : vector<8x8xf32>
    %25 = tpu.matmul %24, %13, %cst_16 {dimension_numbers = #tpu.dot_dimension_numbers<[1], [0], [0], [1], [0, 0, 1, 1], [], []>} : vector<8x8xf32>, vector<8x8xf32>, vector<8x8xf32> -> vector<8x8xf32>
    %c0_17 = arith.constant 0 : index
    %c0_18 = arith.constant 0 : index
    %26 = vector.load %arg14[%c0_17, %c0_18] : memref<8x32xf32, #tpu.memory_space<vmem>>, vector<8x8xf32>
    %27 = arith.addf %26, %25 : vector<8x8xf32>
    %c0_19 = arith.constant 0 : index
    %c0_20 = arith.constant 0 : index
    %28 = vector.load %arg14[%c0_19, %c0_20] : memref<8x32xf32, #tpu.memory_space<vmem>>, vector<8x8xf32>
    tpu.vector_store %arg14[%c0_19, %c0_20], %27 {strides = array<i32>} : memref<8x32xf32, #tpu.memory_space<vmem>>, vector<8x8xf32>,
    %c0_21 = arith.constant 0 : index
    %c8 = arith.constant 8 : index
    %29 = vector.load %arg13[%c0_21, %c8] : memref<8x32xf32, #tpu.memory_space<vmem>>, vector<8x8xf32>
    %30 = vector.extract_strided_slice %8 {offsets = [0, 8], sizes = [8, 8], strides = [1, 1]} : vector<8x32xf32> to vector<8x8xf32>
    %31 = vector.extract_strided_slice %10 {offsets = [0, 8], sizes = [8, 8], strides = [1, 1]} : vector<8x32xf32> to vector<8x8xf32>
    %cst_22 = arith.constant dense<0.000000e+00> : vector<8x8xf32>
    %32 = tpu.matmul %29, %30, %cst_22 {dimension_numbers = #tpu.dot_dimension_numbers<[1], [1], [0], [0], [0, 0, 1, 0], [], []>} : vector<8x8xf32>, vector<8x8xf32>, vector<8x8xf32> -> vector<8x8xf32>
    %cst_23 = arith.constant dense<0xFF800000> : vector<8xf32>
    %33 = vector.multi_reduction <maximumf>, %32, %cst_23 [0] : vector<8x8xf32> to vector<8xf32>
    %34 = vector.shape_cast %33 : vector<8xf32> to vector<1x8xf32>
    %35 = vector.broadcast %34 : vector<1x8xf32> to vector<8x8xf32>
    %36 = arith.subf %32, %35 : vector<8x8xf32>
    %37 = math.exp %36 : vector<8x8xf32>
    %cst_24 = arith.constant dense<0.000000e+00> : vector<8xf32>
    %38 = vector.multi_reduction <add>, %37, %cst_24 [0] : vector<8x8xf32> to vector<8xf32>
    %39 = vector.shape_cast %38 : vector<8xf32> to vector<1x8xf32>
    %40 = tpu.reciprocal %39 : vector<1x8xf32> -> vector<1x8xf32>
    %41 = vector.broadcast %40 : vector<1x8xf32> to vector<8x8xf32>
    %42 = arith.mulf %37, %41 : vector<8x8xf32>
    %cst_25 = arith.constant dense<0.000000e+00> : vector<8x8xf32>
    %43 = tpu.matmul %42, %31, %cst_25 {dimension_numbers = #tpu.dot_dimension_numbers<[1], [0], [0], [1], [0, 0, 1, 1], [], []>} : vector<8x8xf32>, vector<8x8xf32>, vector<8x8xf32> -> vector<8x8xf32>
    %c0_26 = arith.constant 0 : index
    %c8_27 = arith.constant 8 : index
    %44 = vector.load %arg14[%c0_26, %c8_27] : memref<8x32xf32, #tpu.memory_space<vmem>>, vector<8x8xf32>
    %45 = arith.addf %44, %43 : vector<8x8xf32>
    %c0_28 = arith.constant 0 : index
    %c8_29 = arith.constant 8 : index
    %46 = vector.load %arg14[%c0_28, %c8_29] : memref<8x32xf32, #tpu.memory_space<vmem>>, vector<8x8xf32>
    tpu.vector_store %arg14[%c0_28, %c8_29], %45 {strides = array<i32>} : memref<8x32xf32, #tpu.memory_space<vmem>>, vector<8x8xf32>,
    %c0_30 = arith.constant 0 : index
    %c16 = arith.constant 16 : index
    %47 = vector.load %arg13[%c0_30, %c16] : memref<8x32xf32, #tpu.memory_space<vmem>>, vector<8x8xf32>
    %48 = vector.extract_strided_slice %8 {offsets = [0, 16], sizes = [8, 8], strides = [1, 1]} : vector<8x32xf32> to vector<8x8xf32>
    %49 = vector.extract_strided_slice %10 {offsets = [0, 16], sizes = [8, 8], strides = [1, 1]} : vector<8x32xf32> to vector<8x8xf32>
    %cst_31 = arith.constant dense<0.000000e+00> : vector<8x8xf32>
    %50 = tpu.matmul %47, %48, %cst_31 {dimension_numbers = #tpu.dot_dimension_numbers<[1], [1], [0], [0], [0, 0, 1, 0], [], []>} : vector<8x8xf32>, vector<8x8xf32>, vector<8x8xf32> -> vector<8x8xf32>
    %cst_32 = arith.constant dense<0xFF800000> : vector<8xf32>
    %51 = vector.multi_reduction <maximumf>, %50, %cst_32 [0] : vector<8x8xf32> to vector<8xf32>
    %52 = vector.shape_cast %51 : vector<8xf32> to vector<1x8xf32>
    %53 = vector.broadcast %52 : vector<1x8xf32> to vector<8x8xf32>
    %54 = arith.subf %50, %53 : vector<8x8xf32>
    %55 = math.exp %54 : vector<8x8xf32>
    %cst_33 = arith.constant dense<0.000000e+00> : vector<8xf32>
    %56 = vector.multi_reduction <add>, %55, %cst_33 [0] : vector<8x8xf32> to vector<8xf32>
    %57 = vector.shape_cast %56 : vector<8xf32> to vector<1x8xf32>
    %58 = tpu.reciprocal %57 : vector<1x8xf32> -> vector<1x8xf32>
    %59 = vector.broadcast %58 : vector<1x8xf32> to vector<8x8xf32>
    %60 = arith.mulf %55, %59 : vector<8x8xf32>
    %cst_34 = arith.constant dense<0.000000e+00> : vector<8x8xf32>
    %61 = tpu.matmul %60, %49, %cst_34 {dimension_numbers = #tpu.dot_dimension_numbers<[1], [0], [0], [1], [0, 0, 1, 1], [], []>} : vector<8x8xf32>, vector<8x8xf32>, vector<8x8xf32> -> vector<8x8xf32>
    %c0_35 = arith.constant 0 : index
    %c16_36 = arith.constant 16 : index
    %62 = vector.load %arg14[%c0_35, %c16_36] : memref<8x32xf32, #tpu.memory_space<vmem>>, vector<8x8xf32>
    %63 = arith.addf %62, %61 : vector<8x8xf32>
    %c0_37 = arith.constant 0 : index
    %c16_38 = arith.constant 16 : index
    %64 = vector.load %arg14[%c0_37, %c16_38] : memref<8x32xf32, #tpu.memory_space<vmem>>, vector<8x8xf32>
    tpu.vector_store %arg14[%c0_37, %c16_38], %63 {strides = array<i32>} : memref<8x32xf32, #tpu.memory_space<vmem>>, vector<8x8xf32>,
    %c0_39 = arith.constant 0 : index
    %c24 = arith.constant 24 : index
    %65 = vector.load %arg13[%c0_39, %c24] : memref<8x32xf32, #tpu.memory_space<vmem>>, vector<8x8xf32>
    %66 = vector.extract_strided_slice %8 {offsets = [0, 24], sizes = [8, 8], strides = [1, 1]} : vector<8x32xf32> to vector<8x8xf32>
    %67 = vector.extract_strided_slice %10 {offsets = [0, 24], sizes = [8, 8], strides = [1, 1]} : vector<8x32xf32> to vector<8x8xf32>
    %cst_40 = arith.constant dense<0.000000e+00> : vector<8x8xf32>
    %68 = tpu.matmul %65, %66, %cst_40 {dimension_numbers = #tpu.dot_dimension_numbers<[1], [1], [0], [0], [0, 0, 1, 0], [], []>} : vector<8x8xf32>, vector<8x8xf32>, vector<8x8xf32> -> vector<8x8xf32>
    %cst_41 = arith.constant dense<0xFF800000> : vector<8xf32>
    %69 = vector.multi_reduction <maximumf>, %68, %cst_41 [0] : vector<8x8xf32> to vector<8xf32>
    %70 = vector.shape_cast %69 : vector<8xf32> to vector<1x8xf32>
    %71 = vector.broadcast %70 : vector<1x8xf32> to vector<8x8xf32>
    %72 = arith.subf %68, %71 : vector<8x8xf32>
    %73 = math.exp %72 : vector<8x8xf32>
    %cst_42 = arith.constant dense<0.000000e+00> : vector<8xf32>
    %74 = vector.multi_reduction <add>, %73, %cst_42 [0] : vector<8x8xf32> to vector<8xf32>
    %75 = vector.shape_cast %74 : vector<8xf32> to vector<1x8xf32>
    %76 = tpu.reciprocal %75 : vector<1x8xf32> -> vector<1x8xf32>
    %77 = vector.broadcast %76 : vector<1x8xf32> to vector<8x8xf32>
    %78 = arith.mulf %73, %77 : vector<8x8xf32>
    %cst_43 = arith.constant dense<0.000000e+00> : vector<8x8xf32>
    %79 = tpu.matmul %78, %67, %cst_43 {dimension_numbers = #tpu.dot_dimension_numbers<[1], [0], [0], [1], [0, 0, 1, 1], [], []>} : vector<8x8xf32>, vector<8x8xf32>, vector<8x8xf32> -> vector<8x8xf32>
    %c0_44 = arith.constant 0 : index
    %c24_45 = arith.constant 24 : index
    %80 = vector.load %arg14[%c0_44, %c24_45] : memref<8x32xf32, #tpu.memory_space<vmem>>, vector<8x8xf32>
    %81 = arith.addf %80, %79 : vector<8x8xf32>
    %c0_46 = arith.constant 0 : index
    %c24_47 = arith.constant 24 : index
    %82 = vector.load %arg14[%c0_46, %c24_47] : memref<8x32xf32, #tpu.memory_space<vmem>>, vector<8x8xf32>
    tpu.vector_store %arg14[%c0_46, %c24_47], %81 {strides = array<i32>} : memref<8x32xf32, #tpu.memory_space<vmem>>, vector<8x8xf32>,
    %c0_i32_48 = arith.constant 0 : i32
    %83 = arith.cmpi eq, %arg1, %c0_i32_48 : i32
    %84 = arith.extui %83 : i1 to i32
    %c0_i32_49 = arith.constant 0 : i32
    %85 = arith.cmpi ne, %84, %c0_i32_49 : i32
    scf.if %85 {
      %c0_50 = arith.constant 0 : index
      %c0_51 = arith.constant 0 : index
      %c0_52 = arith.constant 0 : index
      %86 = vector.load %arg2[%c0_50, %c0_51, %c0_52] : memref<1x8x32xf32, #tpu.memory_space<vmem>>, vector<1x8x32xf32>
      %87 = vector.shape_cast %86 : vector<1x8x32xf32> to vector<8x32xf32>
      %c0_53 = arith.constant 0 : index
      %c0_54 = arith.constant 0 : index
      %88 = vector.load %arg14[%c0_53, %c0_54] : memref<8x32xf32, #tpu.memory_space<vmem>>, vector<8x32xf32>
      %c0_55 = arith.constant 0 : index
      %c0_56 = arith.constant 0 : index
      %89 = vector.load %arg8[%c0_55, %c0_56] : memref<32x32xf32, #tpu.memory_space<vmem>>, vector<32x32xf32>
      %cst_57 = arith.constant dense<0.000000e+00> : vector<8x32xf32>
      %90 = tpu.matmul %88, %89, %cst_57 {dimension_numbers = #tpu.dot_dimension_numbers<[1], [0], [0], [1], [0, 0, 1, 1], [], []>} : vector<8x32xf32>, vector<32x32xf32>, vector<8x32xf32> -> vector<8x32xf32>
      %c0_58 = arith.constant 0 : index
      %c0_59 = arith.constant 0 : index
      %91 = vector.load %arg9[%c0_58, %c0_59] : memref<32x32xf32, #tpu.memory_space<vmem>>, vector<32x32xf32>
      %cst_60 = arith.constant dense<0.000000e+00> : vector<8x32xf32>
      %92 = tpu.matmul %87, %91, %cst_60 {dimension_numbers = #tpu.dot_dimension_numbers<[1], [0], [0], [1], [0, 0, 1, 1], [], []>} : vector<8x32xf32>, vector<32x32xf32>, vector<8x32xf32> -> vector<8x32xf32>
      %c0_61 = arith.constant 0 : index
      %c0_62 = arith.constant 0 : index
      %93 = vector.load %arg10[%c0_61, %c0_62] : memref<32x32xf32, #tpu.memory_space<vmem>>, vector<32x32xf32>
      %cst_63 = arith.constant dense<0.000000e+00> : vector<8x32xf32>
      %94 = tpu.matmul %90, %93, %cst_63 {dimension_numbers = #tpu.dot_dimension_numbers<[1], [0], [0], [1], [0, 0, 1, 1], [], []>} : vector<8x32xf32>, vector<32x32xf32>, vector<8x32xf32> -> vector<8x32xf32>
      %95 = arith.addf %92, %94 : vector<8x32xf32>
      %c0_64 = arith.constant 0 : index
      %c0_65 = arith.constant 0 : index
      %96 = vector.load %arg11[%c0_64, %c0_65] : memref<1x32xf32, #tpu.memory_space<vmem>>, vector<1x32xf32>
      %97 = vector.broadcast %96 : vector<1x32xf32> to vector<8x32xf32>
      %98 = arith.addf %95, %97 : vector<8x32xf32>
      %99 = arith.negf %98 : vector<8x32xf32>
      %100 = math.exp %99 : vector<8x32xf32>
      %cst_66 = arith.constant 1.000000e+00 : f32
      %101 = vector.broadcast %cst_66 : f32 to vector<8x32xf32>
      %102 = arith.addf %101, %100 : vector<8x32xf32>
      %103 = arith.divf %101, %102 : vector<8x32xf32>
      %104 = arith.mulf %103, %87 : vector<8x32xf32>
      %cst_67 = arith.constant 1.000000e+00 : f32
      %105 = vector.broadcast %cst_67 : f32 to vector<8x32xf32>
      %106 = arith.subf %105, %103 : vector<8x32xf32>
      %107 = arith.mulf %106, %90 : vector<8x32xf32>
      %108 = arith.addf %104, %107 : vector<8x32xf32>
      %c0_68 = arith.constant 0 : index
      %c0_69 = arith.constant 0 : index
      %c0_70 = arith.constant 0 : index
      %109 = vector.load %arg12[%c0_68, %c0_69, %c0_70] : memref<1x8x32xf32, #tpu.memory_space<vmem>>, vector<1x8x32xf32>
      %110 = vector.shape_cast %109 : vector<1x8x32xf32> to vector<8x32xf32>
      %111 = vector.shape_cast %108 : vector<8x32xf32> to vector<1x8x32xf32>
      tpu.vector_store %arg12[%c0_68, %c0_69, %c0_70], %111 {strides = array<i32>} : memref<1x8x32xf32, #tpu.memory_space<vmem>>, vector<1x8x32xf32>,
    } else {
    }
    return
  }
  func.func @transform_0(%arg0: i32, %arg1: i32) -> (i32, i32, i32) {
    %c0_i32 = arith.constant 0 : i32
    %c0_i32_0 = arith.constant 0 : i32
    %c0_i32_1 = arith.constant 0 : i32
    return %arg0, %c0_i32, %c0_i32_0 : i32, i32, i32
  }
  func.func @transform_1(%arg0: i32, %arg1: i32) -> (i32, i32, i32) {
    %c0_i32 = arith.constant 0 : i32
    %c0_i32_0 = arith.constant 0 : i32
    return %arg0, %arg1, %c0_i32 : i32, i32, i32
  }
  func.func @transform_2(%arg0: i32, %arg1: i32) -> (i32, i32, i32) {
    %c0_i32 = arith.constant 0 : i32
    %c0_i32_0 = arith.constant 0 : i32
    return %arg0, %arg1, %c0_i32 : i32, i32, i32
  }
  func.func @transform_3(%arg0: i32, %arg1: i32) -> (i32, i32) {
    %c0_i32 = arith.constant 0 : i32
    %c0_i32_0 = arith.constant 0 : i32
    %c0_i32_1 = arith.constant 0 : i32
    return %c0_i32, %c0_i32_0 : i32, i32
  }
  func.func @transform_4(%arg0: i32, %arg1: i32) -> (i32, i32) {
    %c0_i32 = arith.constant 0 : i32
    %c0_i32_0 = arith.constant 0 : i32
    %c0_i32_1 = arith.constant 0 : i32
    return %c0_i32, %c0_i32_0 : i32, i32
  }
  func.func @transform_5(%arg0: i32, %arg1: i32) -> (i32, i32) {
    %c0_i32 = arith.constant 0 : i32
    %c0_i32_0 = arith.constant 0 : i32
    %c0_i32_1 = arith.constant 0 : i32
    return %c0_i32, %c0_i32_0 : i32, i32
  }
  func.func @transform_6(%arg0: i32, %arg1: i32) -> (i32, i32) {
    %c0_i32 = arith.constant 0 : i32
    %c0_i32_0 = arith.constant 0 : i32
    %c0_i32_1 = arith.constant 0 : i32
    return %c0_i32, %c0_i32_0 : i32, i32
  }
  func.func @transform_7(%arg0: i32, %arg1: i32) -> (i32, i32) {
    %c0_i32 = arith.constant 0 : i32
    %c0_i32_0 = arith.constant 0 : i32
    %c0_i32_1 = arith.constant 0 : i32
    return %c0_i32, %c0_i32_0 : i32, i32
  }
  func.func @transform_8(%arg0: i32, %arg1: i32) -> (i32, i32) {
    %c0_i32 = arith.constant 0 : i32
    %c0_i32_0 = arith.constant 0 : i32
    %c0_i32_1 = arith.constant 0 : i32
    return %c0_i32, %c0_i32_0 : i32, i32
  }
  func.func @transform_9(%arg0: i32, %arg1: i32) -> (i32, i32) {
    %c0_i32 = arith.constant 0 : i32
    %c0_i32_0 = arith.constant 0 : i32
    %c0_i32_1 = arith.constant 0 : i32
    return %c0_i32, %c0_i32_0 : i32, i32
  }
  func.func @transform_10(%arg0: i32, %arg1: i32) -> (i32, i32, i32) {
    %c0_i32 = arith.constant 0 : i32
    %c0_i32_0 = arith.constant 0 : i32
    %c0_i32_1 = arith.constant 0 : i32
    return %arg0, %c0_i32, %c0_i32_0 : i32, i32, i32
  }
}

</mosaic_0001>

<llo_original>
// kernel: tpu_custom_call.1
$region0: #{tpu_custom_call.1}
  #allocation0 [shape = 'u32[]', space=smem, size = 0x4, offset = 0x4, fixed_abs, tag = 'smem constant byte address 0x4 - core index']
  #allocation1 [shape = 'u32[72,128]{1,0:T(1,128)}', space=vmem, size = 0x9000, scoped, tag = 'internal scratch']
  #allocation2 [shape = 'f32[8,32]{1,0:T(8,128)}', space=vmem, size = 0x1000, scoped, tag = 'scratch operand']
  #allocation3 [shape = 'f32[8,32]{1,0:T(8,128)}', space=vmem, size = 0x1000, scoped, tag = 'scratch operand']
  %s0 = inlined_call_operand.hbm [shape: f32[2,8,32], index: 0, kind: input, shape index: {}]
  %s1 = inlined_call_operand.hbm [shape: f32[2,8,32], index: 1, kind: input, shape index: {}]
  %s2 = inlined_call_operand.hbm [shape: f32[2,8,32], index: 2, kind: input, shape index: {}]
  %s3 = inlined_call_operand.hbm [shape: f32[32,32], index: 3, kind: input, shape index: {}]
  %s4 = inlined_call_operand.hbm [shape: f32[32,32], index: 4, kind: input, shape index: {}]
  %s5 = inlined_call_operand.hbm [shape: f32[32,32], index: 5, kind: input, shape index: {}]
  %s6 = inlined_call_operand.hbm [shape: f32[32,32], index: 6, kind: input, shape index: {}]
  %s7 = inlined_call_operand.hbm [shape: f32[32,32], index: 7, kind: input, shape index: {}]
  %s8 = inlined_call_operand.hbm [shape: f32[32,32], index: 8, kind: input, shape index: {}]
  %s9 = inlined_call_operand.vmem [shape: f32[1,32], index: 9, kind: input, shape index: {}]
  %s10 = inlined_call_operand.hbm [shape: f32[2,8,32], index: 10, kind: output, shape index: {}]
  %s11 = sld [smem:[#allocation0]]
  $region117: #{tpu_custom_call.1} parent=0
    _
  %s13 = ssub.s32 1, %s11
  %s14 = scalar_select 0, %s13, %s11
  $region1: #{tpu_custom_call.1} parent=0
    #allocation4 [shape = 'u8[8192]{0}', space=vmem, size = 0x2000, scoped, tag = 'input window, operand 0']
    #allocation5 [shape = 's32[2]{0}', space=sflag, size = 0x8, scoped, tag = 'scoped memory for tpu_custom_call.1']
    #allocation6 [shape = 's32[2]{0}', space=sflag, size = 0x8, scoped, tag = 'scoped memory for tpu_custom_call.1']
    #allocation7 [shape = 'u8[8192]{0}', space=vmem, size = 0x2000, scoped, tag = 'input window, operand 1']
    #allocation8 [shape = 's32[2]{0}', space=sflag, size = 0x8, scoped, tag = 'scoped memory for tpu_custom_call.1']
    #allocation9 [shape = 'u8[8192]{0}', space=vmem, size = 0x2000, scoped, tag = 'input window, operand 2']
    #allocation10 [shape = 'u8[16384]{0}', space=vmem, size = 0x4000, scoped, tag = 'input window, operand 3, single buffered']
    #allocation11 [shape = 's32[1]{0}', space=sflag, size = 0x4, scoped, tag = 'scoped memory for tpu_custom_call.1']
    #allocation12 [shape = 'u8[16384]{0}', space=vmem, size = 0x4000, scoped, tag = 'input window, operand 4, single buffered']
    #allocation13 [shape = 'u8[16384]{0}', space=vmem, size = 0x4000, scoped, tag = 'input window, operand 5, single buffered']
    #allocation14 [shape = 's32[1]{0}', space=sflag, size = 0x4, scoped, tag = 'scoped memory for tpu_custom_call.1']
    #allocation15 [shape = 'u8[16384]{0}', space=vmem, size = 0x4000, scoped, tag = 'input window, operand 6, single buffered']
    #allocation16 [shape = 'u8[16384]{0}', space=vmem, size = 0x4000, scoped, tag = 'input window, operand 7, single buffered']
    #allocation17 [shape = 's32[1]{0}', space=sflag, size = 0x4, scoped, tag = 'scoped memory for tpu_custom_call.1']
    #allocation18 [shape = 'u8[16384]{0}', space=vmem, size = 0x4000, scoped, tag = 'input window, operand 8, single buffered']
    #allocation19 [shape = 'u8[8192]{0}', space=vmem, size = 0x2000, scoped, tag = 'output window, operand 0']
    %15 = vsyncpa [#allocation5], 0
    %s16 = scalar_lea.sflag [#allocation5], 1
    %17 = vsyncpa %s16, 0
    %18 = vsyncpa [#allocation8], 0
    %s19 = scalar_lea.sflag [#allocation8], 1
    %20 = vsyncpa %s19, 0
    %21 = vsyncpa [#allocation11], 0
    %22 = vsyncpa [#allocation14], 0
    %23 = vsyncpa [#allocation17], 0
    %24 = vsyncpa [#allocation6], 0
    %s25 = scalar_lea.sflag [#allocation6], 1
    %26 = vsyncpa %s25, 0
    loop: start=0, step=1, limit=4
    $region2: #{tpu_custom_call.1} parent=1 // loop_pre_header
      _
    $region3: #{tpu_custom_call.1} parent=1 // loop_header
      %s28 = sphi 0, %s32
      %p29 = scmp.ge.s32.totalorder %s28, 4
      %s35 = sphi 0, %s47
      %s36 = sphi 0, %s43
      %s37 = sphi 0, %s35
      %s38 = sphi 0, %s36
      %s39 = sphi 0, %s37
      %s40 = sphi 0, %s38
      %s50 = sphi 0, %s52
      %s53 = sphi 0, %s50
      %s54 = sphi 0, %s53
      %s70 = sphi 0, %s54
      %s78 = sphi 0, %s80
      %s81 = sphi 0, %s78
      %s82 = sphi 0, %s81
      %s98 = sphi 0, %s82
      %s106 = sphi 0, %s108
      %s109 = sphi 0, %s106
      %s110 = sphi 0, %s109
      %s126 = sphi 0, %s110
      %s130 = sphi 0, %s130
      %s132 = sphi 0, %s130
      %s133 = sphi 0, %s132
      %s147 = sphi 0, %s133
      %s151 = sphi 0, %s151
      %s153 = sphi 0, %s151
      %s154 = sphi 0, %s153
      %s168 = sphi 0, %s154
      %s172 = sphi 0, %s172
      %s174 = sphi 0, %s172
      %s175 = sphi 0, %s174
      %s189 = sphi 0, %s175
      %s193 = sphi 0, %s193
      %s195 = sphi 0, %s193
      %s196 = sphi 0, %s195
      %s210 = sphi 0, %s196
      %s214 = sphi 0, %s214
      %s216 = sphi 0, %s214
      %s217 = sphi 0, %s216
      %s231 = sphi 0, %s217
      %s235 = sphi 0, %s235
      %s237 = sphi 0, %s235
      %s238 = sphi 0, %s237
      %s252 = sphi 0, %s238
      %s256 = sphi 0, %s256
      %s258 = sphi 0, %s256
      %s259 = sphi 0, %s258
      %s273 = sphi 0, %s259
      %s279 = sphi 0, %s281
      %s282 = sphi 0, %s279
      %s283 = sphi 0, %s282
      %s299 = sphi 0, %s283
    $region4: #{tpu_custom_call.1} parent=1 // loop_header_branch
      %31 = sbr.rel (%p29) target = $region8
    $region5: #{tpu_custom_call.1} parent=1 // loop_body
      %s33 = ssub.s32 %s28, 1
      %s34 = ssub.s32 %s28, 2
      %s41 = sadd.s32 1, %s36
      %p42 = scmp.ge.s32.totalorder %s41, 1
      %s43 = scalar_select %p42, 0, %s41
      %s44 = sadd.s32 1, %s35
      %s45 = scalar_select %p42, %s44, %s35
      %p46 = scmp.ge.s32.totalorder %s45, 2
      %s47 = scalar_select %p46, 0, %s45
      %s48 = ssub.s32 %s35, %s47
      %p49 = scmp.eq.s32.totalorder %s48, 0
      %s51 = sadd.s32 %s50, 1
      %s52 = scalar_select %p49, %s50, %s51
      %p55 = pneg %p49
      %p56 = scmp.eq.s32.totalorder %s28, 1
      %p57 = por %p55, %p56
      %p58 = scmp.ne.s32.totalorder %s50, %s53
      %p59 = scmp.eq.s32.totalorder %s28, 0
      %p60 = por %p58, %p59
      %p61 = scmp.ne.s32.totalorder %s50, %s53
      %p62 = scmp.eq.s32.totalorder %s33, 1
      %p63 = por %p61, %p62
      %p64 = scmp.ne.s32.totalorder %s53, %s54
      %p65 = scmp.eq.s32.totalorder %s33, 0
      %p66 = por %p64, %p65
      %p67 = scmp.ne.s32.totalorder %s53, %s54
      %p68 = scmp.eq.s32.totalorder %s34, 1
      %p69 = por %p67, %p68
      %p71 = scmp.ne.s32.totalorder %s54, %s70
      %p72 = scmp.eq.s32.totalorder %s34, 0
      %p73 = por %p71, %p72
      %s74 = ssub.s32 %s35, %s47
      %s75 = ssub.s32 %s36, %s43
      %s76 = sor.u32 %s74, %s75
      %p77 = scmp.eq.s32.totalorder %s76, 0
      %s79 = sadd.s32 %s78, 1
      %s80 = scalar_select %p77, %s78, %s79
      %p83 = pneg %p77
      %p84 = scmp.eq.s32.totalorder %s28, 1
      %p85 = por %p83, %p84
      %p86 = scmp.ne.s32.totalorder %s78, %s81
      %p87 = scmp.eq.s32.totalorder %s28, 0
      %p88 = por %p86, %p87
      %p89 = scmp.ne.s32.totalorder %s78, %s81
      %p90 = scmp.eq.s32.totalorder %s33, 1
      %p91 = por %p89, %p90
      %p92 = scmp.ne.s32.totalorder %s81, %s82
      %p93 = scmp.eq.s32.totalorder %s33, 0
      %p94 = por %p92, %p93
      %p95 = scmp.ne.s32.totalorder %s81, %s82
      %p96 = scmp.eq.s32.totalorder %s34, 1
      %p97 = por %p95, %p96
      %p99 = scmp.ne.s32.totalorder %s82, %s98
      %p100 = scmp.eq.s32.totalorder %s34, 0
      %p101 = por %p99, %p100
      %s102 = ssub.s32 %s35, %s47
      %s103 = ssub.s32 %s36, %s43
      %s104 = sor.u32 %s102, %s103
      %p105 = scmp.eq.s32.totalorder %s104, 0
      %s107 = sadd.s32 %s106, 1
      %s108 = scalar_select %p105, %s106, %s107
      %p111 = pneg %p105
      %p112 = scmp.eq.s32.totalorder %s28, 1
      %p113 = por %p111, %p112
      %p114 = scmp.ne.s32.totalorder %s106, %s109
      %p115 = scmp.eq.s32.totalorder %s28, 0
      %p116 = por %p114, %p115
      %p117 = scmp.ne.s32.totalorder %s106, %s109
      %p118 = scmp.eq.s32.totalorder %s33, 1
      %p119 = por %p117, %p118
      %p120 = scmp.ne.s32.totalorder %s109, %s110
      %p121 = scmp.eq.s32.totalorder %s33, 0
      %p122 = por %p120, %p121
      %p123 = scmp.ne.s32.totalorder %s109, %s110
      %p124 = scmp.eq.s32.totalorder %s34, 1
      %p125 = por %p123, %p124
      %p127 = scmp.ne.s32.totalorder %s110, %s126
      %p128 = scmp.eq.s32.totalorder %s34, 0
      %p129 = por %p127, %p128
      %s131 = sadd.s32 %s130, 1
      %p134 = scmp.eq.s32.totalorder %s28, 1
      %p135 = scmp.ne.s32.totalorder %s130, %s132
      %p136 = scmp.eq.s32.totalorder %s28, 0
      %p137 = por %p135, %p136
      %p138 = scmp.ne.s32.totalorder %s130, %s132
      %p139 = scmp.eq.s32.totalorder %s33, 1
      %p140 = por %p138, %p139
      %p141 = scmp.ne.s32.totalorder %s132, %s133
      %p142 = scmp.eq.s32.totalorder %s33, 0
      %p143 = por %p141, %p142
      %p144 = scmp.ne.s32.totalorder %s132, %s133
      %p145 = scmp.eq.s32.totalorder %s34, 1
      %p146 = por %p144, %p145
      %p148 = scmp.ne.s32.totalorder %s133, %s147
      %p149 = scmp.eq.s32.totalorder %s34, 0
      %p150 = por %p148, %p149
      %s152 = sadd.s32 %s151, 1
      %p155 = scmp.eq.s32.totalorder %s28, 1
      %p156 = scmp.ne.s32.totalorder %s151, %s153
      %p157 = scmp.eq.s32.totalorder %s28, 0
      %p158 = por %p156, %p157
      %p159 = scmp.ne.s32.totalorder %s151, %s153
      %p160 = scmp.eq.s32.totalorder %s33, 1
      %p161 = por %p159, %p160
      %p162 = scmp.ne.s32.totalorder %s153, %s154
      %p163 = scmp.eq.s32.totalorder %s33, 0
      %p164 = por %p162, %p163
      %p165 = scmp.ne.s32.totalorder %s153, %s154
      %p166 = scmp.eq.s32.totalorder %s34, 1
      %p167 = por %p165, %p166
      %p169 = scmp.ne.s32.totalorder %s154, %s168
      %p170 = scmp.eq.s32.totalorder %s34, 0
      %p171 = por %p169, %p170
      %s173 = sadd.s32 %s172, 1
      %p176 = scmp.eq.s32.totalorder %s28, 1
      %p177 = scmp.ne.s32.totalorder %s172, %s174
      %p178 = scmp.eq.s32.totalorder %s28, 0
      %p179 = por %p177, %p178
      %p180 = scmp.ne.s32.totalorder %s172, %s174
      %p181 = scmp.eq.s32.totalorder %s33, 1
      %p182 = por %p180, %p181
      %p183 = scmp.ne.s32.totalorder %s174, %s175
      %p184 = scmp.eq.s32.totalorder %s33, 0
      %p185 = por %p183, %p184
      %p186 = scmp.ne.s32.totalorder %s174, %s175
      %p187 = scmp.eq.s32.totalorder %s34, 1
      %p188 = por %p186, %p187
      %p190 = scmp.ne.s32.totalorder %s175, %s189
      %p191 = scmp.eq.s32.totalorder %s34, 0
      %p192 = por %p190, %p191
      %s194 = sadd.s32 %s193, 1
      %p197 = scmp.eq.s32.totalorder %s28, 1
      %p198 = scmp.ne.s32.totalorder %s193, %s195
      %p199 = scmp.eq.s32.totalorder %s28, 0
      %p200 = por %p198, %p199
      %p201 = scmp.ne.s32.totalorder %s193, %s195
      %p202 = scmp.eq.s32.totalorder %s33, 1
      %p203 = por %p201, %p202
      %p204 = scmp.ne.s32.totalorder %s195, %s196
      %p205 = scmp.eq.s32.totalorder %s33, 0
      %p206 = por %p204, %p205
      %p207 = scmp.ne.s32.totalorder %s195, %s196
      %p208 = scmp.eq.s32.totalorder %s34, 1
      %p209 = por %p207, %p208
      %p211 = scmp.ne.s32.totalorder %s196, %s210
      %p212 = scmp.eq.s32.totalorder %s34, 0
      %p213 = por %p211, %p212
      %s215 = sadd.s32 %s214, 1
      %p218 = scmp.eq.s32.totalorder %s28, 1
      %p219 = scmp.ne.s32.totalorder %s214, %s216
      %p220 = scmp.eq.s32.totalorder %s28, 0
      %p221 = por %p219, %p220
      %p222 = scmp.ne.s32.totalorder %s214, %s216
      %p223 = scmp.eq.s32.totalorder %s33, 1
      %p224 = por %p222, %p223
      %p225 = scmp.ne.s32.totalorder %s216, %s217
      %p226 = scmp.eq.s32.totalorder %s33, 0
      %p227 = por %p225, %p226
      %p228 = scmp.ne.s32.totalorder %s216, %s217
      %p229 = scmp.eq.s32.totalorder %s34, 1
      %p230 = por %p228, %p229
      %p232 = scmp.ne.s32.totalorder %s217, %s231
      %p233 = scmp.eq.s32.totalorder %s34, 0
      %p234 = por %p232, %p233
      %s236 = sadd.s32 %s235, 1
      %p239 = scmp.eq.s32.totalorder %s28, 1
      %p240 = scmp.ne.s32.totalorder %s235, %s237
      %p241 = scmp.eq.s32.totalorder %s28, 0
      %p242 = por %p240, %p241
      %p243 = scmp.ne.s32.totalorder %s235, %s237
      %p244 = scmp.eq.s32.totalorder %s33, 1
      %p245 = por %p243, %p244
      %p246 = scmp.ne.s32.totalorder %s237, %s238
      %p247 = scmp.eq.s32.totalorder %s33, 0
      %p248 = por %p246, %p247
      %p249 = scmp.ne.s32.totalorder %s237, %s238
      %p250 = scmp.eq.s32.totalorder %s34, 1
      %p251 = por %p249, %p250
      %p253 = scmp.ne.s32.totalorder %s238, %s252
      %p254 = scmp.eq.s32.totalorder %s34, 0
      %p255 = por %p253, %p254
      %s257 = sadd.s32 %s256, 1
      %p260 = scmp.eq.s32.totalorder %s28, 1
      %p261 = scmp.ne.s32.totalorder %s256, %s258
      %p262 = scmp.eq.s32.totalorder %s28, 0
      %p263 = por %p261, %p262
      %p264 = scmp.ne.s32.totalorder %s256, %s258
      %p265 = scmp.eq.s32.totalorder %s33, 1
      %p266 = por %p264, %p265
      %p267 = scmp.ne.s32.totalorder %s258, %s259
      %p268 = scmp.eq.s32.totalorder %s33, 0
      %p269 = por %p267, %p268
      %p270 = scmp.ne.s32.totalorder %s258, %s259
      %p271 = scmp.eq.s32.totalorder %s34, 1
      %p272 = por %p270, %p271
      %p274 = scmp.ne.s32.totalorder %s259, %s273
      %p275 = scmp.eq.s32.totalorder %s34, 0
      %p276 = por %p274, %p275
      %s277 = ssub.s32 %s35, %s47
      %p278 = scmp.eq.s32.totalorder %s277, 0
      %s280 = sadd.s32 %s279, 1
      %s281 = scalar_select %p278, %s279, %s280
      %p284 = pneg %p278
      %p285 = scmp.eq.s32.totalorder %s28, 1
      %p286 = por %p284, %p285
      %p287 = scmp.ne.s32.totalorder %s279, %s282
      %p288 = scmp.eq.s32.totalorder %s28, 0
      %p289 = por %p287, %p288
      %p290 = scmp.ne.s32.totalorder %s279, %s282
      %p291 = scmp.eq.s32.totalorder %s33, 1
      %p292 = por %p290, %p291
      %p293 = scmp.ne.s32.totalorder %s282, %s283
      %p294 = scmp.eq.s32.totalorder %s33, 0
      %p295 = por %p293, %p294
      %p296 = scmp.ne.s32.totalorder %s282, %s283
      %p297 = scmp.eq.s32.totalorder %s34, 1
      %p298 = por %p296, %p297
      %p300 = scmp.ne.s32.totalorder %s283, %s299
      %p301 = scmp.eq.s32.totalorder %s34, 0
      %p302 = por %p300, %p301
      %p303 = scmp.le.s32.totalorder 1, %s28
      %p304 = scmp.lt.s32.totalorder %s28, 3
      %p305 = pnand %p303, %p304
      %p306 = pneg %p305
      // Predicated region
      $region9: #{tpu_custom_call.1} parent=5 // pred_check
        _
      $region10: #{tpu_custom_call.1} parent=5 // pred_check_branch
        %308 = sbr.rel (%p305) target = $region12
      $region11: #{tpu_custom_call.1} parent=5 // pred_region
        %s309 = ssub.s32 %s28, 1
        // Predicated region
        $region13: #{tpu_custom_call.1} parent=11 // pred_check
          %p310 = pneg %p143
        $region14: #{tpu_custom_call.1} parent=11 // pred_check_branch
          %312 = sbr.rel (%p310) target = $region16
        $region15: #{tpu_custom_call.1} parent=11 // pred_region
          %314 = vsyncadd [#allocation11], 0
          %s315 = sshll.u32 %s3, 4
          %s316 = int_to_ptr.hbm [resolvable:$true] %s315
          %s317 = sshll.u32 [#allocation10], 4
          %s318 = int_to_ptr.vmem [resolvable:$true] %s317
          %323 = dma.hbm_to_vmem [thread:$0]  %s316, 512, %s318, [#allocation11], 128, 128, 8
        $region16: #{tpu_custom_call.1} parent=11 // pred_fallthru
          _
        // Predicated region
        $region17: #{tpu_custom_call.1} parent=11 // pred_check
          %p324 = pneg %p164
        $region18: #{tpu_custom_call.1} parent=11 // pred_check_branch
          %326 = sbr.rel (%p324) target = $region20
        $region19: #{tpu_custom_call.1} parent=11 // pred_region
          %328 = vsyncadd [#allocation11], 0
          %s329 = sshll.u32 %s4, 4
          %s330 = int_to_ptr.hbm [resolvable:$true] %s329
          %s331 = sshll.u32 [#allocation12], 4
          %s332 = int_to_ptr.vmem [resolvable:$true] %s331
          %337 = dma.hbm_to_vmem [thread:$0]  %s330, 512, %s332, [#allocation11], 128, 128, 8
        $region20: #{tpu_custom_call.1} parent=11 // pred_fallthru
          _
        // Predicated region
        $region21: #{tpu_custom_call.1} parent=11 // pred_check
          %p338 = pneg %p185
        $region22: #{tpu_custom_call.1} parent=11 // pred_check_branch
          %340 = sbr.rel (%p338) target = $region24
        $region23: #{tpu_custom_call.1} parent=11 // pred_region
          %342 = vsyncadd [#allocation14], 0
          %s343 = sshll.u32 %s5, 4
          %s344 = int_to_ptr.hbm [resolvable:$true] %s343
          %s345 = sshll.u32 [#allocation13], 4
          %s346 = int_to_ptr.vmem [resolvable:$true] %s345
          %351 = dma.hbm_to_vmem [thread:$0]  %s344, 512, %s346, [#allocation14], 128, 128, 8
        $region24: #{tpu_custom_call.1} parent=11 // pred_fallthru
          _
        // Predicated region
        $region25: #{tpu_custom_call.1} parent=11 // pred_check
          %p352 = pneg %p206
        $region26: #{tpu_custom_call.1} parent=11 // pred_check_branch
          %354 = sbr.rel (%p352) target = $region28
        $region27: #{tpu_custom_call.1} parent=11 // pred_region
          %356 = vsyncadd [#allocation14], 0
          %s357 = sshll.u32 %s6, 4
          %s358 = int_to_ptr.hbm [resolvable:$true] %s357
          %s359 = sshll.u32 [#allocation15], 4
          %s360 = int_to_ptr.vmem [resolvable:$true] %s359
          %365 = dma.hbm_to_vmem [thread:$0]  %s358, 512, %s360, [#allocation14], 128, 128, 8
        $region28: #{tpu_custom_call.1} parent=11 // pred_fallthru
          _
        // Predicated region
        $region29: #{tpu_custom_call.1} parent=11 // pred_check
          %p366 = pneg %p227
        $region30: #{tpu_custom_call.1} parent=11 // pred_check_branch
          %368 = sbr.rel (%p366) target = $region32
        $region31: #{tpu_custom_call.1} parent=11 // pred_region
          %370 = vsyncadd [#allocation17], 0
          %s371 = sshll.u32 %s7, 4
          %s372 = int_to_ptr.hbm [resolvable:$true] %s371
          %s373 = sshll.u32 [#allocation16], 4
          %s374 = int_to_ptr.vmem [resolvable:$true] %s373
          %379 = dma.hbm_to_vmem [thread:$0]  %s372, 512, %s374, [#allocation17], 128, 128, 8
        $region32: #{tpu_custom_call.1} parent=11 // pred_fallthru
          _
        // Predicated region
        $region33: #{tpu_custom_call.1} parent=11 // pred_check
          %p380 = pneg %p248
        $region34: #{tpu_custom_call.1} parent=11 // pred_check_branch
          %382 = sbr.rel (%p380) target = $region36
        $region35: #{tpu_custom_call.1} parent=11 // pred_region
          %384 = vsyncadd [#allocation17], 0
          %s385 = sshll.u32 %s8, 4
          %s386 = int_to_ptr.hbm [resolvable:$true] %s385
          %s387 = sshll.u32 [#allocation18], 4
          %s388 = int_to_ptr.vmem [resolvable:$true] %s387
          %393 = dma.hbm_to_vmem [thread:$0]  %s386, 512, %s388, [#allocation17], 128, 128, 8
        $region36: #{tpu_custom_call.1} parent=11 // pred_fallthru
          _
        // Predicated region
        $region37: #{tpu_custom_call.1} parent=11 // pred_check
          %p394 = pneg %p269
        $region38: #{tpu_custom_call.1} parent=11 // pred_check_branch
          %396 = sbr.rel (%p394) target = $region40
        $region39: #{tpu_custom_call.1} parent=11 // pred_region
          _
        $region40: #{tpu_custom_call.1} parent=11 // pred_fallthru
          _
      $region12: #{tpu_custom_call.1} parent=5 // pred_fallthru
        _
      %p397 = scmp.lt.s32.totalorder %s28, 2
      // Predicated region
      $region41: #{tpu_custom_call.1} parent=5 // pred_check
        %p398 = pneg %p397
      $region42: #{tpu_custom_call.1} parent=5 // pred_check_branch
        %400 = sbr.rel (%p398) target = $region44
      $region43: #{tpu_custom_call.1} parent=5 // pred_region
        // Predicated region
        $region45: #{tpu_custom_call.1} parent=43 // pred_check
          %p401 = pneg %p60
        $region46: #{tpu_custom_call.1} parent=43 // pred_check_branch
          %403 = sbr.rel (%p401) target = $region48
        $region47: #{tpu_custom_call.1} parent=43 // pred_region
          %s404 = sand.u32 %s50, 1
          %s405 = scalar_lea.sflag [#allocation5], %s404
          %s406 = sand.u32 %s50, 1
          %s407 = smul.addr %s406, 8
          %s408 = scalar_lea.vmem [#allocation4], %s407
          %410 = vsyncadd %s405, 0
          %s411 = smul.addr %s35, 8
          %s412 = scalar_lea.hbm %s0, %s411
          %s414 = sshll.u32 %s412, 4
          %s415 = int_to_ptr.hbm [resolvable:$true] %s414
          %s416 = sshll.u32 %s408, 4
          %s417 = int_to_ptr.vmem [resolvable:$true] %s416
          %419 = dma.hbm_to_vmem [thread:$0]  %s415, 128, %s417, %s405
        $region48: #{tpu_custom_call.1} parent=43 // pred_fallthru
          _
        // Predicated region
        $region49: #{tpu_custom_call.1} parent=43 // pred_check
          %p420 = pneg %p88
        $region50: #{tpu_custom_call.1} parent=43 // pred_check_branch
          %422 = sbr.rel (%p420) target = $region52
        $region51: #{tpu_custom_call.1} parent=43 // pred_region
          %s423 = sand.u32 %s28, 1
          %s424 = scalar_lea.sflag [#allocation8], %s423
          %s425 = sand.u32 %s78, 1
          %s426 = smul.addr %s425, 8
          %s427 = scalar_lea.vmem [#allocation7], %s426
          %429 = vsyncadd %s424, 0
          %s430 = sadd.s32 %s36, %s35
          %s431 = smul.addr %s430, 8
          %s432 = scalar_lea.hbm %s1, %s431
          %s434 = sshll.u32 %s432, 4
          %s435 = int_to_ptr.hbm [resolvable:$true] %s434
          %s436 = sshll.u32 %s427, 4
          %s437 = int_to_ptr.vmem [resolvable:$true] %s436
          %439 = dma.hbm_to_vmem [thread:$0]  %s435, 128, %s437, %s424
        $region52: #{tpu_custom_call.1} parent=43 // pred_fallthru
          _
        // Predicated region
        $region53: #{tpu_custom_call.1} parent=43 // pred_check
          %p440 = pneg %p116
        $region54: #{tpu_custom_call.1} parent=43 // pred_check_branch
          %442 = sbr.rel (%p440) target = $region56
        $region55: #{tpu_custom_call.1} parent=43 // pred_region
          %s443 = sand.u32 %s28, 1
          %s444 = scalar_lea.sflag [#allocation8], %s443
          %s445 = sand.u32 %s106, 1
          %s446 = smul.addr %s445, 8
          %s447 = scalar_lea.vmem [#allocation9], %s446
          %449 = vsyncadd %s444, 0
          %s450 = sadd.s32 %s36, %s35
          %s451 = smul.addr %s450, 8
          %s452 = scalar_lea.hbm %s2, %s451
          %s454 = sshll.u32 %s452, 4
          %s455 = int_to_ptr.hbm [resolvable:$true] %s454
          %s456 = sshll.u32 %s447, 4
          %s457 = int_to_ptr.vmem [resolvable:$true] %s456
          %459 = dma.hbm_to_vmem [thread:$0]  %s455, 128, %s457, %s444
        $region56: #{tpu_custom_call.1} parent=43 // pred_fallthru
          _
      $region44: #{tpu_custom_call.1} parent=5 // pred_fallthru
        _
      %p460 = scmp.le.s32.totalorder 1, %s28
      %p461 = scmp.lt.s32.totalorder %s28, 3
      %p462 = pnand %p460, %p461
      %p463 = pneg %p462
      // Predicated region
      $region57: #{tpu_custom_call.1} parent=5 // pred_check
        _
      $region58: #{tpu_custom_call.1} parent=5 // pred_check_branch
        %465 = sbr.rel (%p462) target = $region60
      $region59: #{tpu_custom_call.1} parent=5 // pred_region
        %s466 = ssub.s32 %s28, 1
        %s467 = sand.u32 %s53, 1
        %s468 = scalar_lea.sflag [#allocation5], %s467
        %s469 = sand.u32 %s53, 1
        %s470 = smul.addr %s469, 8
        %s471 = scalar_lea.vmem [#allocation4], %s470
        // Predicated region
        $region61: #{tpu_custom_call.1} parent=59 // pred_check
          %p472 = pneg %p66
        $region62: #{tpu_custom_call.1} parent=59 // pred_check_branch
          %474 = sbr.rel (%p472) target = $region64
        $region63: #{tpu_custom_call.1} parent=59 // pred_region
          %476 = dma.done %s468, 128
        $region64: #{tpu_custom_call.1} parent=59 // pred_fallthru
          _
        %s477 = sand.u32 %s33, 1
        %s478 = scalar_lea.sflag [#allocation8], %s477
        %s479 = sand.u32 %s81, 1
        %s480 = smul.addr %s479, 8
        %s481 = scalar_lea.vmem [#allocation7], %s480
        // Predicated region
        $region65: #{tpu_custom_call.1} parent=59 // pred_check
          %p482 = pneg %p94
        $region66: #{tpu_custom_call.1} parent=59 // pred_check_branch
          %484 = sbr.rel (%p482) target = $region68
        $region67: #{tpu_custom_call.1} parent=59 // pred_region
          %486 = dma.done %s478, 128
        $region68: #{tpu_custom_call.1} parent=59 // pred_fallthru
          _
        %s487 = sand.u32 %s33, 1
        %s488 = scalar_lea.sflag [#allocation8], %s487
        %s489 = sand.u32 %s109, 1
        %s490 = smul.addr %s489, 8
        %s491 = scalar_lea.vmem [#allocation9], %s490
        // Predicated region
        $region69: #{tpu_custom_call.1} parent=59 // pred_check
          %p492 = pneg %p122
        $region70: #{tpu_custom_call.1} parent=59 // pred_check_branch
          %494 = sbr.rel (%p492) target = $region72
        $region71: #{tpu_custom_call.1} parent=59 // pred_region
          %496 = dma.done %s488, 128
        $region72: #{tpu_custom_call.1} parent=59 // pred_fallthru
          _
        // Predicated region
        $region73: #{tpu_custom_call.1} parent=59 // pred_check
          %p497 = pneg %p143
        $region74: #{tpu_custom_call.1} parent=59 // pred_check_branch
          %499 = sbr.rel (%p497) target = $region76
        $region75: #{tpu_custom_call.1} parent=59 // pred_region
          %501 = dma.done [#allocation11], 512
        $region76: #{tpu_custom_call.1} parent=59 // pred_fallthru
          _
        // Predicated region
        $region77: #{tpu_custom_call.1} parent=59 // pred_check
          %p502 = pneg %p164
        $region78: #{tpu_custom_call.1} parent=59 // pred_check_branch
          %504 = sbr.rel (%p502) target = $region80
        $region79: #{tpu_custom_call.1} parent=59 // pred_region
          %506 = dma.done [#allocation11], 512
        $region80: #{tpu_custom_call.1} parent=59 // pred_fallthru
          _
        // Predicated region
        $region81: #{tpu_custom_call.1} parent=59 // pred_check
          %p507 = pneg %p185
        $region82: #{tpu_custom_call.1} parent=59 // pred_check_branch
          %509 = sbr.rel (%p507) target = $region84
        $region83: #{tpu_custom_call.1} parent=59 // pred_region
          %511 = dma.done [#allocation14], 512
        $region84: #{tpu_custom_call.1} parent=59 // pred_fallthru
          _
        // Predicated region
        $region85: #{tpu_custom_call.1} parent=59 // pred_check
          %p512 = pneg %p206
        $region86: #{tpu_custom_call.1} parent=59 // pred_check_branch
          %514 = sbr.rel (%p512) target = $region88
        $region87: #{tpu_custom_call.1} parent=59 // pred_region
          %516 = dma.done [#allocation14], 512
        $region88: #{tpu_custom_call.1} parent=59 // pred_fallthru
          _
        // Predicated region
        $region89: #{tpu_custom_call.1} parent=59 // pred_check
          %p517 = pneg %p227
        $region90: #{tpu_custom_call.1} parent=59 // pred_check_branch
          %519 = sbr.rel (%p517) target = $region92
        $region91: #{tpu_custom_call.1} parent=59 // pred_region
          %521 = dma.done [#allocation17], 512
        $region92: #{tpu_custom_call.1} parent=59 // pred_fallthru
          _
        // Predicated region
        $region93: #{tpu_custom_call.1} parent=59 // pred_check
          %p522 = pneg %p248
        $region94: #{tpu_custom_call.1} parent=59 // pred_check_branch
          %524 = sbr.rel (%p522) target = $region96
        $region95: #{tpu_custom_call.1} parent=59 // pred_region
          %526 = dma.done [#allocation17], 512
        $region96: #{tpu_custom_call.1} parent=59 // pred_fallthru
          _
        %s527 = sand.u32 %s53, 1
        %s528 = scalar_lea.sflag [#allocation5], %s527
        %s529 = sand.u32 %s53, 1
        %s530 = smul.addr %s529, 8
        %s531 = scalar_lea.vmem [#allocation4], %s530
        %p532 = pneg %p66
        %p533 = pneg %p63
        %s534 = sand.u32 %s33, 1
        %s535 = scalar_lea.sflag [#allocation8], %s534
        %s536 = sand.u32 %s81, 1
        %s537 = smul.addr %s536, 8
        %s538 = scalar_lea.vmem [#allocation7], %s537
        %p539 = pneg %p94
        %p540 = pneg %p91
        %s541 = sand.u32 %s33, 1
        %s542 = scalar_lea.sflag [#allocation8], %s541
        %s543 = sand.u32 %s109, 1
        %s544 = smul.addr %s543, 8
        %s545 = scalar_lea.vmem [#allocation9], %s544
        %p546 = pneg %p122
        %p547 = pneg %p119
        %p548 = pneg %p143
        %p549 = pneg %p140
        %p550 = pneg %p164
        %p551 = pneg %p161
        %p552 = pneg %p185
        %p553 = pneg %p182
        %p554 = pneg %p206
        %p555 = pneg %p203
        %p556 = pneg %p227
        %p557 = pneg %p224
        %p558 = pneg %p248
        %p559 = pneg %p245
        %p560 = pneg %p269
        %p561 = pneg %p266
        %p562 = pneg %p295
        %p563 = pneg %p292
        %s564 = sand.u32 %s282, 1
        %s565 = scalar_lea.sflag [#allocation6], %s564
        %s566 = sand.u32 %s282, 1
        %s567 = smul.addr %s566, 8
        %s568 = scalar_lea.vmem [#allocation19], %s567
        %p569 = scmp.eq.s32.totalorder %s38, 0
        // Predicated region
        $region97: #{tpu_custom_call.1} parent=59 // pred_check
          %p570 = pneg %p569
        $region98: #{tpu_custom_call.1} parent=59 // pred_check_branch
          %572 = sbr.rel (%p570) target = $region100
        $region99: #{tpu_custom_call.1} parent=59 // pred_region
          %v573 = vld [vmem:[%s471] sm:$0xff]
          %v574 = vld [vmem:[#allocation10] sm:$0xff]
          %v575 = vld [vmem:[#allocation10 + $0x8] sm:$0xff]
          %v576 = vld [vmem:[#allocation10 + $0x10] sm:$0xff]
          %v577 = vld [vmem:[#allocation10 + $0x18] sm:$0xff]
          %vm578 = vcmask 261120
          %v580 = vsel %vm578, %v573, 0
          %582 = vmatpush.msra.mxu0 0.0
          %583 = vmatpush.msra.mxu0 0.0
          %584 = vmatpush.msra.mxu0 0.0
          %585 = vmatpush.msra.mxu0 0.0
          %586 = vmatpush.msra.mxu0 0.0
          %587 = vmatpush.msra.mxu0 0.0
          %588 = vmatpush.msra.mxu0 0.0
          %589 = vmatpush.msra.mxu0 0.0
          %590 = vmatpush.msra.mxu0 0.0
          %591 = vmatpush.msra.mxu0 0.0
          %592 = vmatpush.msra.mxu0 0.0
          %593 = vmatpush.msra.mxu0 0.0
          %594 = vmatpush.msra.mxu0 %v577
          %595 = vmatpush.msra.mxu0 %v576
          %596 = vmatpush.msra.mxu0 %v575
          %597 = vmatpush.msra.mxu0 %v574
          %598 = vmatmul.f32.gmra.mxu0 %v580
          %v599 = vpop.f32.mrf.mxu0
          %v600 = vadd.f32 0.0, %v599
          %601 = vdwg.mxu0
          %602 = vst.msk [vmem:[#allocation2] sm:$0xff] %vm578, %v600
          %603 = vst.msk [vmem:[#allocation3] sm:$0xff] %vm578, 0.0
        $region100: #{tpu_custom_call.1} parent=59 // pred_fallthru
          _
        %v604 = vld [vmem:[%s481] sm:$0xff]
        %v605 = vld [vmem:[%s491] sm:$0xff]
        %v606 = vld [vmem:[#allocation12] sm:$0xff]
        %v607 = vld [vmem:[#allocation12 + $0x8] sm:$0xff]
        %v608 = vld [vmem:[#allocation12 + $0x10] sm:$0xff]
        %v609 = vld [vmem:[#allocation12 + $0x18] sm:$0xff]
        %vm610 = vcmask 261120
        %v612 = vsel %vm610, %v604, 0
        %614 = vmatpush.msra.mxu0 0.0
        %615 = vmatpush.msra.mxu0 0.0
        %616 = vmatpush.msra.mxu0 0.0
        %617 = vmatpush.msra.mxu0 0.0
        %618 = vmatpush.msra.mxu0 0.0
        %619 = vmatpush.msra.mxu0 0.0
        %620 = vmatpush.msra.mxu0 0.0
        %621 = vmatpush.msra.mxu0 0.0
        %622 = vmatpush.msra.mxu0 0.0
        %623 = vmatpush.msra.mxu0 0.0
        %624 = vmatpush.msra.mxu0 0.0
        %625 = vmatpush.msra.mxu0 0.0
        %626 = vmatpush.msra.mxu0 %v609
        %627 = vmatpush.msra.mxu0 %v608
        %628 = vmatpush.msra.mxu0 %v607
        %629 = vmatpush.msra.mxu0 %v606
        %630 = vmatmul.f32.gmra.mxu0 %v612
        %v631 = vpop.f32.mrf.mxu0
        %v632 = vadd.f32 0.0, %v631
        %633 = vdwg.mxu0
        %v634 = vld [vmem:[#allocation13] sm:$0xff]
        %v635 = vld [vmem:[#allocation13 + $0x8] sm:$0xff]
        %v636 = vld [vmem:[#allocation13 + $0x10] sm:$0xff]
        %v637 = vld [vmem:[#allocation13 + $0x18] sm:$0xff]
        %v639 = vsel %vm610, %v605, 0
        %641 = vmatpush.msra.mxu0 0.0
        %642 = vmatpush.msra.mxu0 0.0
        %643 = vmatpush.msra.mxu0 0.0
        %644 = vmatpush.msra.mxu0 0.0
        %645 = vmatpush.msra.mxu0 0.0
        %646 = vmatpush.msra.mxu0 0.0
        %647 = vmatpush.msra.mxu0 0.0
        %648 = vmatpush.msra.mxu0 0.0
        %649 = vmatpush.msra.mxu0 0.0
        %650 = vmatpush.msra.mxu0 0.0
        %651 = vmatpush.msra.mxu0 0.0
        %652 = vmatpush.msra.mxu0 0.0
        %653 = vmatpush.msra.mxu0 %v637
        %654 = vmatpush.msra.mxu0 %v636
        %655 = vmatpush.msra.mxu0 %v635
        %656 = vmatpush.msra.mxu0 %v634
        %657 = vmatmul.f32.gmra.mxu0 %v639
        %v658 = vpop.f32.mrf.mxu0
        %v659 = vadd.f32 0.0, %v658
        %660 = vdwg.mxu0
        %v661 = vld [vmem:[#allocation2] sm:$0xff]
        %vm662 = vcmask 64512
        %v664 = vsel %vm662, %v661, 0
        %v667 = vsel %vm662, %v632, 0
        %669 = vmatpush.xpose.msra.mxu0 0.0
        %670 = vmatpush.xpose.msra.mxu0 0.0
        %671 = vmatpush.xpose.msra.mxu0 0.0
        %672 = vmatpush.xpose.msra.mxu0 0.0
        %673 = vmatpush.xpose.msra.mxu0 0.0
        %674 = vmatpush.xpose.msra.mxu0 0.0
        %675 = vmatpush.xpose.msra.mxu0 0.0
        %676 = vmatpush.xpose.msra.mxu0 0.0
        %677 = vmatpush.xpose.msra.mxu0 0.0
        %678 = vmatpush.xpose.msra.mxu0 0.0
        %679 = vmatpush.xpose.msra.mxu0 0.0
        %680 = vmatpush.xpose.msra.mxu0 0.0
        %681 = vmatpush.xpose.msra.mxu0 0.0
        %682 = vmatpush.xpose.msra.mxu0 0.0
        %683 = vmatpush.xpose.msra.mxu0 0.0
        %684 = vmatpush.xpose.msra.mxu0 %v667
        %685 = vmatmul.f32.gmra.mxu0 %v664
        %v686 = vpop.f32.mrf.mxu0
        %v687 = vadd.f32 0.0, %v686
        %688 = vdwg.mxu0
        %v689 = vsel %vm662, %v687, -inf
        %v690 = vrot.slane %v689, 4
        %v691 = vmax.f32 %v689, %v690
        %v692 = vrot.slane %v691, 2
        %v693 = vmax.f32 %v691, %v692
        %v694 = vrot.slane %v693, 1
        %v695 = vmax.f32 %v693, %v694
        %v696 = vsub.f32 %v687, %v695
        %v697 = vmul.f32 %v696, 1.442695
        %v698 = vpow.pop %v697
        %v699 = vsel %vm662, %v698, 0.0
        %v700 = vrot.slane %v699, 4
        %v701 = vadd.f32 %v699, %v700
        %v702 = vrot.slane %v701, 2
        %v703 = vadd.f32 %v701, %v702
        %v704 = vrot.slane %v703, 1
        %v705 = vadd.f32 %v703, %v704
        %v706 = vrcp.pop %v705
        %v707 = vmul.f32 %v705, %v706
        %v708 = vsub.f32 1.0, %v707
        %v709 = vmul.f32 %v706, %v708
        %v710 = vadd.f32 %v706, %v709
        %vm711 = vweird.f32 %v705
        %vm712 = vweird.f32 %v706
        %vm713 = vmor %vm711, %vm712
        %v714 = vsel %vm713, %v706, %v710
        %v715 = vand.u32 2147483647, %v705
        %vm716 = vcmp.eq.f32.partialorder %v715, 8.507059e+37
        %v717 = vand.u32 %v705, 2147483648
        %v718 = vor.u32 1.1754944e-38, %v717
        %v719 = vsel %vm716, %v718, %v714
        %v720 = vmul.f32 %v698, %v719
        %v722 = vsel %vm662, %v720, 0
        %724 = vmatpush.msra.mxu0 0.0
        %725 = vmatpush.msra.mxu0 0.0
        %726 = vmatpush.msra.mxu0 0.0
        %727 = vmatpush.msra.mxu0 0.0
        %728 = vmatpush.msra.mxu0 0.0
        %729 = vmatpush.msra.mxu0 0.0
        %730 = vmatpush.msra.mxu0 0.0
        %731 = vmatpush.msra.mxu0 0.0
        %732 = vmatpush.msra.mxu0 0.0
        %733 = vmatpush.msra.mxu0 0.0
        %734 = vmatpush.msra.mxu0 0.0
        %735 = vmatpush.msra.mxu0 0.0
        %736 = vmatpush.msra.mxu0 0.0
        %737 = vmatpush.msra.mxu0 0.0
        %738 = vmatpush.msra.mxu0 0.0
        %739 = vmatpush.msra.mxu0 %v659
        %740 = vmatmul.f32.gmra.mxu0 %v722
        %v741 = vpop.f32.mrf.mxu0
        %v742 = vadd.f32 0.0, %v741
        %743 = vdwg.mxu0
        %v744 = vld [vmem:[#allocation3] sm:$0xff]
        %v745 = vadd.f32 %v744, %v742
        %746 = vst.msk [vmem:[#allocation3] sm:$0xff] %vm662, %v745
        %v747 = vld [vmem:[#allocation2] sm:$0xff]
        %749 = vrot.lane.b32.xlu0 %v747, 120
        %v750 = vpop.permute.xlu0 %749
        %751 = vrot.lane.b32.xlu0 %v632, 120
        %v752 = vpop.permute.xlu0 %751
        %v753 = vsel %vm662, %v750, 0
        %v755 = vsel %vm662, %v752, 0
        %757 = vmatpush.xpose.msra.mxu0 0.0
        %758 = vmatpush.xpose.msra.mxu0 0.0
        %759 = vmatpush.xpose.msra.mxu0 0.0
        %760 = vmatpush.xpose.msra.mxu0 0.0
        %761 = vmatpush.xpose.msra.mxu0 0.0
        %762 = vmatpush.xpose.msra.mxu0 0.0
        %763 = vmatpush.xpose.msra.mxu0 0.0
        %764 = vmatpush.xpose.msra.mxu0 0.0
        %765 = vmatpush.xpose.msra.mxu0 0.0
        %766 = vmatpush.xpose.msra.mxu0 0.0
        %767 = vmatpush.xpose.msra.mxu0 0.0
        %768 = vmatpush.xpose.msra.mxu0 0.0
        %769 = vmatpush.xpose.msra.mxu0 0.0
        %770 = vmatpush.xpose.msra.mxu0 0.0
        %771 = vmatpush.xpose.msra.mxu0 0.0
        %772 = vmatpush.xpose.msra.mxu0 %v755
        %773 = vmatmul.f32.gmra.mxu0 %v753
        %v774 = vpop.f32.mrf.mxu0
        %v775 = vadd.f32 0.0, %v774
        %776 = vdwg.mxu0
        %v777 = vsel %vm662, %v775, -inf
        %v778 = vrot.slane %v777, 4
        %v779 = vmax.f32 %v777, %v778
        %v780 = vrot.slane %v779, 2
        %v781 = vmax.f32 %v779, %v780
        %v782 = vrot.slane %v781, 1
        %v783 = vmax.f32 %v781, %v782
        %v784 = vsub.f32 %v775, %v783
        %v785 = vmul.f32 %v784, 1.442695
        %v786 = vpow.pop %v785
        %v787 = vsel %vm662, %v786, 0.0
        %v788 = vrot.slane %v787, 4
        %v789 = vadd.f32 %v787, %v788
        %v790 = vrot.slane %v789, 2
        %v791 = vadd.f32 %v789, %v790
        %v792 = vrot.slane %v791, 1
        %v793 = vadd.f32 %v791, %v792
        %v794 = vrcp.pop %v793
        %v795 = vmul.f32 %v793, %v794
        %v796 = vsub.f32 1.0, %v795
        %v797 = vmul.f32 %v794, %v796
        %v798 = vadd.f32 %v794, %v797
        %vm799 = vweird.f32 %v793
        %vm800 = vweird.f32 %v794
        %vm801 = vmor %vm799, %vm800
        %v802 = vsel %vm801, %v794, %v798
        %v803 = vand.u32 2147483647, %v793
        %vm804 = vcmp.eq.f32.partialorder %v803, 8.507059e+37
        %v805 = vand.u32 %v793, 2147483648
        %v806 = vor.u32 1.1754944e-38, %v805
        %v807 = vsel %vm804, %v806, %v802
        %v808 = vmul.f32 %v786, %v807
        %810 = vrot.lane.b32.xlu0 %v659, 120
        %v811 = vpop.permute.xlu0 %810
        %v814 = vsel %vm662, %v808, 0
        %816 = vmatpush.msra.mxu0 0.0
        %817 = vmatpush.msra.mxu0 0.0
        %818 = vmatpush.msra.mxu0 0.0
        %819 = vmatpush.msra.mxu0 0.0
        %820 = vmatpush.msra.mxu0 0.0
        %821 = vmatpush.msra.mxu0 0.0
        %822 = vmatpush.msra.mxu0 0.0
        %823 = vmatpush.msra.mxu0 0.0
        %824 = vmatpush.msra.mxu0 0.0
        %825 = vmatpush.msra.mxu0 0.0
        %826 = vmatpush.msra.mxu0 0.0
        %827 = vmatpush.msra.mxu0 0.0
        %828 = vmatpush.msra.mxu0 0.0
        %829 = vmatpush.msra.mxu0 0.0
        %830 = vmatpush.msra.mxu0 0.0
        %831 = vmatpush.msra.mxu0 %v811
        %832 = vmatmul.f32.gmra.mxu0 %v814
        %v833 = vpop.f32.mrf.mxu0
        %v834 = vadd.f32 0.0, %v833
        %835 = vdwg.mxu0
        %v836 = vld [vmem:[#allocation3] sm:$0xff]
        %838 = vrot.lane.b32.xlu0 %v834, 8
        %v839 = vpop.permute.xlu0 %838
        %v841 = vadd.f32 %v836, %v839
        %vm842 = vcmask 130112
        %843 = vst.msk [vmem:[#allocation3] sm:$0xff] %vm842, %v841
        %v844 = vld [vmem:[#allocation2] sm:$0xff]
        %846 = vrot.lane.b32.xlu0 %v844, 112
        %v847 = vpop.permute.xlu0 %846
        %848 = vrot.lane.b32.xlu0 %v632, 112
        %v849 = vpop.permute.xlu0 %848
        %v850 = vsel %vm662, %v847, 0
        %v852 = vsel %vm662, %v849, 0
        %854 = vmatpush.xpose.msra.mxu0 0.0
        %855 = vmatpush.xpose.msra.mxu0 0.0
        %856 = vmatpush.xpose.msra.mxu0 0.0
        %857 = vmatpush.xpose.msra.mxu0 0.0
        %858 = vmatpush.xpose.msra.mxu0 0.0
        %859 = vmatpush.xpose.msra.mxu0 0.0
        %860 = vmatpush.xpose.msra.mxu0 0.0
        %861 = vmatpush.xpose.msra.mxu0 0.0
        %862 = vmatpush.xpose.msra.mxu0 0.0
        %863 = vmatpush.xpose.msra.mxu0 0.0
        %864 = vmatpush.xpose.msra.mxu0 0.0
        %865 = vmatpush.xpose.msra.mxu0 0.0
        %866 = vmatpush.xpose.msra.mxu0 0.0
        %867 = vmatpush.xpose.msra.mxu0 0.0
        %868 = vmatpush.xpose.msra.mxu0 0.0
        %869 = vmatpush.xpose.msra.mxu0 %v852
        %870 = vmatmul.f32.gmra.mxu0 %v850
        %v871 = vpop.f32.mrf.mxu0
        %v872 = vadd.f32 0.0, %v871
        %873 = vdwg.mxu0
        %v874 = vsel %vm662, %v872, -inf
        %v875 = vrot.slane %v874, 4
        %v876 = vmax.f32 %v874, %v875
        %v877 = vrot.slane %v876, 2
        %v878 = vmax.f32 %v876, %v877
        %v879 = vrot.slane %v878, 1
        %v880 = vmax.f32 %v878, %v879
        %v881 = vsub.f32 %v872, %v880
        %v882 = vmul.f32 %v881, 1.442695
        %v883 = vpow.pop %v882
        %v884 = vsel %vm662, %v883, 0.0
        %v885 = vrot.slane %v884, 4
        %v886 = vadd.f32 %v884, %v885
        %v887 = vrot.slane %v886, 2
        %v888 = vadd.f32 %v886, %v887
        %v889 = vrot.slane %v888, 1
        %v890 = vadd.f32 %v888, %v889
        %v891 = vrcp.pop %v890
        %v892 = vmul.f32 %v890, %v891
        %v893 = vsub.f32 1.0, %v892
        %v894 = vmul.f32 %v891, %v893
        %v895 = vadd.f32 %v891, %v894
        %vm896 = vweird.f32 %v890
        %vm897 = vweird.f32 %v891
        %vm898 = vmor %vm896, %vm897
        %v899 = vsel %vm898, %v891, %v895
        %v900 = vand.u32 2147483647, %v890
        %vm901 = vcmp.eq.f32.partialorder %v900, 8.507059e+37
        %v902 = vand.u32 %v890, 2147483648
        %v903 = vor.u32 1.1754944e-38, %v902
        %v904 = vsel %vm901, %v903, %v899
        %v905 = vmul.f32 %v883, %v904
        %906 = vrot.lane.b32.xlu0 %v659, 112
        %v907 = vpop.permute.xlu0 %906
        %v910 = vsel %vm662, %v905, 0
        %912 = vmatpush.msra.mxu0 0.0
        %913 = vmatpush.msra.mxu0 0.0
        %914 = vmatpush.msra.mxu0 0.0
        %915 = vmatpush.msra.mxu0 0.0
        %916 = vmatpush.msra.mxu0 0.0
        %917 = vmatpush.msra.mxu0 0.0
        %918 = vmatpush.msra.mxu0 0.0
        %919 = vmatpush.msra.mxu0 0.0
        %920 = vmatpush.msra.mxu0 0.0
        %921 = vmatpush.msra.mxu0 0.0
        %922 = vmatpush.msra.mxu0 0.0
        %923 = vmatpush.msra.mxu0 0.0
        %924 = vmatpush.msra.mxu0 0.0
        %925 = vmatpush.msra.mxu0 0.0
        %926 = vmatpush.msra.mxu0 0.0
        %927 = vmatpush.msra.mxu0 %v907
        %928 = vmatmul.f32.gmra.mxu0 %v910
        %v929 = vpop.f32.mrf.mxu0
        %v930 = vadd.f32 0.0, %v929
        %931 = vdwg.mxu0
        %v932 = vld [vmem:[#allocation3] sm:$0xff]
        %934 = vrot.lane.b32.xlu0 %v930, 16
        %v935 = vpop.permute.xlu0 %934
        %v937 = vadd.f32 %v932, %v935
        %vm938 = vcmask 195712
        %939 = vst.msk [vmem:[#allocation3] sm:$0xff] %vm938, %v937
        %v940 = vld [vmem:[#allocation2] sm:$0xff]
        %942 = vrot.lane.b32.xlu0 %v940, 104
        %v943 = vpop.permute.xlu0 %942
        %944 = vrot.lane.b32.xlu0 %v632, 104
        %v945 = vpop.permute.xlu0 %944
        %v946 = vsel %vm662, %v943, 0
        %v948 = vsel %vm662, %v945, 0
        %950 = vmatpush.xpose.msra.mxu0 0.0
        %951 = vmatpush.xpose.msra.mxu0 0.0
        %952 = vmatpush.xpose.msra.mxu0 0.0
        %953 = vmatpush.xpose.msra.mxu0 0.0
        %954 = vmatpush.xpose.msra.mxu0 0.0
        %955 = vmatpush.xpose.msra.mxu0 0.0
        %956 = vmatpush.xpose.msra.mxu0 0.0
        %957 = vmatpush.xpose.msra.mxu0 0.0
        %958 = vmatpush.xpose.msra.mxu0 0.0
        %959 = vmatpush.xpose.msra.mxu0 0.0
        %960 = vmatpush.xpose.msra.mxu0 0.0
        %961 = vmatpush.xpose.msra.mxu0 0.0
        %962 = vmatpush.xpose.msra.mxu0 0.0
        %963 = vmatpush.xpose.msra.mxu0 0.0
        %964 = vmatpush.xpose.msra.mxu0 0.0
        %965 = vmatpush.xpose.msra.mxu0 %v948
        %966 = vmatmul.f32.gmra.mxu0 %v946
        %v967 = vpop.f32.mrf.mxu0
        %v968 = vadd.f32 0.0, %v967
        %969 = vdwg.mxu0
        %v970 = vsel %vm662, %v968, -inf
        %v971 = vrot.slane %v970, 4
        %v972 = vmax.f32 %v970, %v971
        %v973 = vrot.slane %v972, 2
        %v974 = vmax.f32 %v972, %v973
        %v975 = vrot.slane %v974, 1
        %v976 = vmax.f32 %v974, %v975
        %v977 = vsub.f32 %v968, %v976
        %v978 = vmul.f32 %v977, 1.442695
        %v979 = vpow.pop %v978
        %v980 = vsel %vm662, %v979, 0.0
        %v981 = vrot.slane %v980, 4
        %v982 = vadd.f32 %v980, %v981
        %v983 = vrot.slane %v982, 2
        %v984 = vadd.f32 %v982, %v983
        %v985 = vrot.slane %v984, 1
        %v986 = vadd.f32 %v984, %v985
        %v987 = vrcp.pop %v986
        %v988 = vmul.f32 %v986, %v987
        %v989 = vsub.f32 1.0, %v988
        %v990 = vmul.f32 %v987, %v989
        %v991 = vadd.f32 %v987, %v990
        %vm992 = vweird.f32 %v986
        %vm993 = vweird.f32 %v987
        %vm994 = vmor %vm992, %vm993
        %v995 = vsel %vm994, %v987, %v991
        %v996 = vand.u32 2147483647, %v986
        %vm997 = vcmp.eq.f32.partialorder %v996, 8.507059e+37
        %v998 = vand.u32 %v986, 2147483648
        %v999 = vor.u32 1.1754944e-38, %v998
        %v1000 = vsel %vm997, %v999, %v995
        %v1001 = vmul.f32 %v979, %v1000
        %1002 = vrot.lane.b32.xlu0 %v659, 104
        %v1003 = vpop.permute.xlu0 %1002
        %v1006 = vsel %vm662, %v1001, 0
        %1008 = vmatpush.msra.mxu0 0.0
        %1009 = vmatpush.msra.mxu0 0.0
        %1010 = vmatpush.msra.mxu0 0.0
        %1011 = vmatpush.msra.mxu0 0.0
        %1012 = vmatpush.msra.mxu0 0.0
        %1013 = vmatpush.msra.mxu0 0.0
        %1014 = vmatpush.msra.mxu0 0.0
        %1015 = vmatpush.msra.mxu0 0.0
        %1016 = vmatpush.msra.mxu0 0.0
        %1017 = vmatpush.msra.mxu0 0.0
        %1018 = vmatpush.msra.mxu0 0.0
        %1019 = vmatpush.msra.mxu0 0.0
        %1020 = vmatpush.msra.mxu0 0.0
        %1021 = vmatpush.msra.mxu0 0.0
        %1022 = vmatpush.msra.mxu0 0.0
        %1023 = vmatpush.msra.mxu0 %v1003
        %1024 = vmatmul.f32.gmra.mxu0 %v1006
        %v1025 = vpop.f32.mrf.mxu0
        %v1026 = vadd.f32 0.0, %v1025
        %1027 = vdwg.mxu0
        %v1028 = vld [vmem:[#allocation3] sm:$0xff]
        %1030 = vrot.lane.b32.xlu0 %v1026, 24
        %v1031 = vpop.permute.xlu0 %1030
        %v1033 = vadd.f32 %v1028, %v1031
        %vm1034 = vcmask 261312
        %1035 = vst.msk [vmem:[#allocation3] sm:$0xff] %vm1034, %v1033
        // Predicated region
        $region101: #{tpu_custom_call.1} parent=59 // pred_check
          %p1036 = pneg %p569
        $region102: #{tpu_custom_call.1} parent=59 // pred_check_branch
          %1038 = sbr.rel (%p1036) target = $region104
        $region103: #{tpu_custom_call.1} parent=59 // pred_region
          %v1039 = vld [vmem:[%s471] sm:$0xff]
          %v1040 = vld [vmem:[#allocation3] sm:$0xff]
          %v1041 = vld [vmem:[#allocation15] sm:$0xff]
          %v1042 = vld [vmem:[#allocation15 + $0x8] sm:$0xff]
          %v1043 = vld [vmem:[#allocation15 + $0x10] sm:$0xff]
          %v1044 = vld [vmem:[#allocation15 + $0x18] sm:$0xff]
          %v1046 = vsel %vm610, %v1040, 0
          %1048 = vmatpush.msra.mxu0 0.0
          %1049 = vmatpush.msra.mxu0 0.0
          %1050 = vmatpush.msra.mxu0 0.0
          %1051 = vmatpush.msra.mxu0 0.0
          %1052 = vmatpush.msra.mxu0 0.0
          %1053 = vmatpush.msra.mxu0 0.0
          %1054 = vmatpush.msra.mxu0 0.0
          %1055 = vmatpush.msra.mxu0 0.0
          %1056 = vmatpush.msra.mxu0 0.0
          %1057 = vmatpush.msra.mxu0 0.0
          %1058 = vmatpush.msra.mxu0 0.0
          %1059 = vmatpush.msra.mxu0 0.0
          %1060 = vmatpush.msra.mxu0 %v1044
          %1061 = vmatpush.msra.mxu0 %v1043
          %1062 = vmatpush.msra.mxu0 %v1042
          %1063 = vmatpush.msra.mxu0 %v1041
          %1064 = vmatmul.f32.gmra.mxu0 %v1046
          %v1065 = vpop.f32.mrf.mxu0
          %v1066 = vadd.f32 0.0, %v1065
          %1067 = vdwg.mxu0
          %v1068 = vld [vmem:[#allocation16] sm:$0xff]
          %v1069 = vld [vmem:[#allocation16 + $0x8] sm:$0xff]
          %v1070 = vld [vmem:[#allocation16 + $0x10] sm:$0xff]
          %v1071 = vld [vmem:[#allocation16 + $0x18] sm:$0xff]
          %v1072 = vld [vmem:[#allocation18] sm:$0xff]
          %v1073 = vld [vmem:[#allocation18 + $0x8] sm:$0xff]
          %v1074 = vld [vmem:[#allocation18 + $0x10] sm:$0xff]
          %v1075 = vld [vmem:[#allocation18 + $0x18] sm:$0xff]
          %v1077 = vsel %vm610, %v1066, 0
          %1079 = vmatpush.msra.mxu0 0.0
          %1080 = vmatpush.msra.mxu0 0.0
          %1081 = vmatpush.msra.mxu0 0.0
          %1082 = vmatpush.msra.mxu0 0.0
          %1083 = vmatpush.msra.mxu0 0.0
          %1084 = vmatpush.msra.mxu0 0.0
          %1085 = vmatpush.msra.mxu0 0.0
          %1086 = vmatpush.msra.mxu0 0.0
          %1087 = vmatpush.msra.mxu0 0.0
          %1088 = vmatpush.msra.mxu0 0.0
          %1089 = vmatpush.msra.mxu0 0.0
          %1090 = vmatpush.msra.mxu0 0.0
          %1091 = vmatpush.msra.mxu0 %v1075
          %1092 = vmatpush.msra.mxu0 %v1074
          %1093 = vmatpush.msra.mxu0 %v1073
          %1094 = vmatpush.msra.mxu0 %v1072
          %1095 = vmatmul.f32.gmra.mxu0 %v1077
          %v1096 = vpop.f32.mrf.mxu0
          %v1097 = vadd.f32 0.0, %v1096
          %1098 = vdwg.mxu0
          %v1100 = vsel %vm610, %v1039, 0
          %1102 = vmatpush.msra.mxu0 0.0
          %1103 = vmatpush.msra.mxu0 0.0
          %1104 = vmatpush.msra.mxu0 0.0
          %1105 = vmatpush.msra.mxu0 0.0
          %1106 = vmatpush.msra.mxu0 0.0
          %1107 = vmatpush.msra.mxu0 0.0
          %1108 = vmatpush.msra.mxu0 0.0
          %1109 = vmatpush.msra.mxu0 0.0
          %1110 = vmatpush.msra.mxu0 0.0
          %1111 = vmatpush.msra.mxu0 0.0
          %1112 = vmatpush.msra.mxu0 0.0
          %1113 = vmatpush.msra.mxu0 0.0
          %1114 = vmatpush.msra.mxu0 %v1071
          %1115 = vmatpush.msra.mxu0 %v1070
          %1116 = vmatpush.msra.mxu0 %v1069
          %1117 = vmatpush.msra.mxu0 %v1068
          %1118 = vmatmul.f32.gmra.mxu0 %v1100
          %v1119 = vpop.f32.mrf.mxu0
          %v1120 = vadd.f32 %v1097, %v1119
          %1121 = vdwg.mxu0
          %v1122 = vld [vmem:[%s9] sm:$0x1]
          %v1124 = vperm.slane %v1122, 0
          %v1126 = vadd.f32 %v1120, %v1124
          %v1127 = vxor.u32 %v1126, 2147483648
          %v1128 = vmul.f32 %v1127, 1.442695
          %v1129 = vpow.pop %v1128
          %v1130 = vadd.f32 %v1129, 1.0
          %v1131 = vrcp.pop %v1130
          %v1132 = vmul.f32 %v1130, %v1131
          %v1133 = vsub.f32 1.0, %v1132
          %v1134 = vmul.f32 %v1131, %v1133
          %v1135 = vadd.f32 %v1131, %v1134
          %vm1136 = vweird.f32 %v1130
          %vm1137 = vweird.f32 %v1131
          %vm1138 = vmor %vm1136, %vm1137
          %v1139 = vsel %vm1138, %v1131, %v1135
          %v1140 = vand.u32 2147483647, %v1130
          %vm1141 = vcmp.eq.f32.partialorder %v1140, 8.507059e+37
          %v1142 = vand.u32 %v1130, 2147483648
          %v1143 = vor.u32 1.1754944e-38, %v1142
          %v1144 = vsel %vm1141, %v1143, %v1139
          %v1145 = vmul.f32 1.0, %v1144
          %v1146 = vmul.f32 %v1145, %v1039
          %v1147 = vsub.f32 1.0, %v1145
          %v1148 = vmul.f32 %v1147, %v1066
          %v1149 = vadd.f32 %v1146, %v1148
          %1150 = vst.msk [vmem:[%s568] sm:$0xff] %vm610, %v1149
        $region104: #{tpu_custom_call.1} parent=59 // pred_fallthru
          _
        %s1151 = sand.u32 %s282, 1
        %s1152 = scalar_lea.sflag [#allocation6], %s1151
        %s1153 = sand.u32 %s282, 1
        %s1154 = smul.addr %s1153, 8
        %s1155 = scalar_lea.vmem [#allocation19], %s1154
        // Predicated region
        $region105: #{tpu_custom_call.1} parent=59 // pred_check
          %p1156 = pneg %p292
        $region106: #{tpu_custom_call.1} parent=59 // pred_check_branch
          %1158 = sbr.rel (%p1156) target = $region108
        $region107: #{tpu_custom_call.1} parent=59 // pred_region
          %1160 = vsyncadd %s1152, 0
          %s1161 = smul.addr %s37, 8
          %s1162 = scalar_lea.hbm %s10, %s1161
          %s1164 = sshll.u32 %s1155, 4
          %s1165 = int_to_ptr.vmem [resolvable:$true] %s1164
          %s1166 = sshll.u32 %s1162, 4
          %s1167 = int_to_ptr.hbm [resolvable:$true] %s1166
          %1169 = dma.vmem_to_hbm [thread:$0]  %s1165, 128, %s1167, %s1152
        $region108: #{tpu_custom_call.1} parent=59 // pred_fallthru
          _
      $region60: #{tpu_custom_call.1} parent=5 // pred_fallthru
        _
      %p1170 = scmp.le.s32.totalorder 2, %s28
      // Predicated region
      $region109: #{tpu_custom_call.1} parent=5 // pred_check
        %p1171 = pneg %p1170
      $region110: #{tpu_custom_call.1} parent=5 // pred_check_branch
        %1173 = sbr.rel (%p1171) target = $region112
      $region111: #{tpu_custom_call.1} parent=5 // pred_region
        %s1174 = ssub.s32 %s28, 2
        // Predicated region
        $region113: #{tpu_custom_call.1} parent=111 // pred_check
          %p1175 = pneg %p298
        $region114: #{tpu_custom_call.1} parent=111 // pred_check_branch
          %1177 = sbr.rel (%p1175) target = $region116
        $region115: #{tpu_custom_call.1} parent=111 // pred_region
          %s1178 = sand.u32 %s283, 1
          %s1179 = scalar_lea.sflag [#allocation6], %s1178
          %s1180 = sand.u32 %s283, 1
          %s1181 = smul.addr %s1180, 8
          %s1182 = scalar_lea.vmem [#allocation19], %s1181
          %1184 = dma.done %s1179, 128
        $region116: #{tpu_custom_call.1} parent=111 // pred_fallthru
          _
      $region112: #{tpu_custom_call.1} parent=5 // pred_fallthru
        _
    $region6: #{tpu_custom_call.1} parent=1 // loop_footer
      %s32 = sadd.s32 1, %s28
    $region7: #{tpu_custom_call.1} parent=1 // loop_footer_branch
      %27 = sbr.rel target = $region3
    $region8: #{tpu_custom_call.1} parent=1 // loop_exit
      _
    %1185 = vsyncpa [#allocation5], 1
    %s1186 = scalar_lea.sflag [#allocation5], 1
    %1187 = vsyncpa %s1186, 1
    %1188 = vsyncpa [#allocation8], 1
    %s1189 = scalar_lea.sflag [#allocation8], 1
    %1190 = vsyncpa %s1189, 1
    %1191 = vsyncpa [#allocation11], 1
    %1192 = vsyncpa [#allocation14], 1
    %1193 = vsyncpa [#allocation17], 1
    %1194 = vsyncpa [#allocation6], 1
    %s1195 = scalar_lea.sflag [#allocation6], 1
    %1196 = vsyncpa %s1195, 1

</llo_original>
